<compile_context>
chip_gen: v7x
topology: tpu7x:2x2x1
jax: 0.10.0
libtpu: 0.0.40
codegen_flags: <defaults>
</compile_context>

<pallas_src>
import functools

import jax
import jax.numpy as jnp
from jax.experimental import pallas as pl
from jax.experimental.pallas import tpu as pltpu


LATENT_DIM = 32
HIDDEN_DIMS = [256, 512]
OUTPUT_DIM = 784
PADDED_OUTPUT_DIM = 896          # next multiple of 128 above 784 -> lane-dense stores
IMAGE_SHAPE = (1, 28, 28)
TILE_B = 256                     # MXU-friendly M; comfortably within scoped VMEM on v5e/v6e/v7x


def _round_up(x, m):
    return ((x + m - 1) // m) * m


def _decoder_kernel(z_ref, w1_ref, b1_ref, w2_ref, b2_ref, w3_ref, b3_ref, o_ref):
    # Layer 1: Linear + ReLU (bf16 MXU matmul, f32 accumulation / epilogue)
    h1 = jnp.dot(z_ref[...].astype(jnp.bfloat16), w1_ref[...],
                 preferred_element_type=jnp.float32)
    h1 = jnp.maximum(h1 + b1_ref[...], 0.0)
    # Layer 2: Linear + ReLU
    h2 = jnp.dot(h1.astype(jnp.bfloat16), w2_ref[...],
                 preferred_element_type=jnp.float32)
    h2 = jnp.maximum(h2 + b2_ref[...], 0.0)
    # Output layer: Linear + Sigmoid (padded to 896 lanes; extra columns are zeros)
    logits = jnp.dot(h2.astype(jnp.bfloat16), w3_ref[...],
                     preferred_element_type=jnp.float32)
    o_ref[...] = jax.nn.sigmoid(logits + b3_ref[...])


@functools.partial(jax.jit, static_argnames=("tile_b",))
def decoder_forward(z, params, *, tile_b=TILE_B):
    """z: (B, latent_dim) float32 -> (B, 1, 28, 28) float32."""
    w1, b1, w2, b2, w3, b3 = params
    B = z.shape[0]

    # Stream weights in bf16 (f32 accumulation inside the kernel). Biases stay f32.
    w1b = w1.astype(jnp.bfloat16)
    w2b = w2.astype(jnp.bfloat16)
    # Pad the output layer to 896 lanes with zero columns (lane-dense stores).
    w3b = jnp.pad(w3, ((0, 0), (0, PADDED_OUTPUT_DIM - OUTPUT_DIM))).astype(jnp.bfloat16)
    b3p = jnp.pad(b3, ((0, 0), (0, PADDED_OUTPUT_DIM - OUTPUT_DIM)))

    # Pad the batch to a sublane/tile-aligned size.
    tile_b = min(tile_b, _round_up(B, 8))
    Bp = _round_up(B, tile_b)
    zp = jnp.pad(z, ((0, Bp - B), (0, 0))) if Bp != B else z
    n_tiles = Bp // tile_b

    row_spec = lambda shape: pl.BlockSpec(shape, lambda i: (i, 0))   # batch-tiled
    res_spec = lambda shape: pl.BlockSpec(shape, lambda i: (0, 0))   # VMEM-resident

    flops = 2 * Bp * (LATENT_DIM * HIDDEN_DIMS[0]
                      + HIDDEN_DIMS[0] * HIDDEN_DIMS[1]
                      + HIDDEN_DIMS[1] * PADDED_OUTPUT_DIM)
    bytes_accessed = (zp.size * 4 + Bp * PADDED_OUTPUT_DIM * 4
                      + w1b.size * 2 + w2b.size * 2 + w3b.size * 2
                      + b1.size * 4 + b2.size * 4 + b3p.size * 4)
    cost = pl.CostEstimate(flops=flops,
                           transcendentals=Bp * PADDED_OUTPUT_DIM,
                           bytes_accessed=bytes_accessed)

    out_padded = pl.pallas_call(
        _decoder_kernel,
        out_shape=jax.ShapeDtypeStruct((Bp, PADDED_OUTPUT_DIM), jnp.float32),
        grid_spec=pltpu.PrefetchScalarGridSpec(
            num_scalar_prefetch=0,
            grid=(n_tiles,),
            in_specs=[
                row_spec((tile_b, LATENT_DIM)),
                res_spec(w1b.shape), res_spec(b1.shape),
                res_spec(w2b.shape), res_spec(b2.shape),
                res_spec(w3b.shape), res_spec(b3p.shape),
            ],
            out_specs=row_spec((tile_b, PADDED_OUTPUT_DIM)),
        ),
        compiler_params=pltpu.CompilerParams(
            dimension_semantics=("parallel",),   # shard batch tiles across v7x TCs
        ),
        cost_estimate=cost,
    )(zp, w1b, b1, w2b, b2, w3b, b3p)

    # Drop padded rows/columns, then output.view(B, *image_shape)  (NCHW)
    return out_padded[:B, :OUTPUT_DIM].reshape(B, *IMAGE_SHAPE)


def init_params(key):
    """Deterministic init matching nn.Linear shapes (weights stored as (in, out))."""
    dims = [LATENT_DIM] + HIDDEN_DIMS + [OUTPUT_DIM]
    params = []
    for i in range(len(dims) - 1):
        fan_in, fan_out = dims[i], dims[i + 1]
        key, kw, kb = jax.random.split(key, 3)
        bound = 1.0 / jnp.sqrt(fan_in)
        w = jax.random.uniform(kw, (fan_in, fan_out), jnp.float32, -bound, bound)
        # biases kept 2D (1, out) for TPU-friendly broadcasting inside the kernel
        b = jax.random.uniform(kb, (1, fan_out), jnp.float32, -bound, bound)
        params.extend([w, b])
    return tuple(params)


def reference_forward(z, params):
    """Reference with identical bf16-weight / f32-accumulation quantization."""
    w1, b1, w2, b2, w3, b3 = params
    bf = jnp.bfloat16
    h1 = jnp.maximum(
        jnp.dot(z.astype(bf), w1.astype(bf), preferred_element_type=jnp.float32) + b1, 0.0)
    h2 = jnp.maximum(
        jnp.dot(h1.astype(bf), w2.astype(bf), preferred_element_type=jnp.float32) + b2, 0.0)
    out = jax.nn.sigmoid(
        jnp.dot(h2.astype(bf), w3.astype(bf), preferred_element_type=jnp.float32) + b3)
    return out.reshape(z.shape[0], *IMAGE_SHAPE)


if __name__ == "__main__":
    key = jax.random.PRNGKey(0)
    key, kz = jax.random.split(key)

    B = 2
    z = jax.random.normal(kz, (B, LATENT_DIM), jnp.float32)
    params = init_params(key)

    out = decoder_forward(z, params)
    out = jax.block_until_ready(out)

    ref = reference_forward(z, params)
    assert out.shape == (B, *IMAGE_SHAPE), out.shape
    assert jnp.allclose(out, ref, atol=2e-3, rtol=2e-3), float(
        jnp.max(jnp.abs(out - ref))
    )

    # Sanity-check a larger, non-tile-aligned batch exercises the grid path too.
    Bbig = 300
    zbig = jax.random.normal(jax.random.PRNGKey(1), (Bbig, LATENT_DIM), jnp.float32)
    out_big = jax.block_until_ready(decoder_forward(zbig, params))
    ref_big = reference_forward(zbig, params)
    assert out_big.shape == (Bbig, *IMAGE_SHAPE)
    assert jnp.allclose(out_big, ref_big, atol=2e-3, rtol=2e-3), float(
        jnp.max(jnp.abs(out_big - ref_big))
    )

    print("KERNEL_OK")
</pallas_src>

<mosaic_0001>
module attributes {stable_mosaic.version = 11 : i64} {
  func.func @_decoder_kernel(%arg0: i32, %arg1: memref<8x32xf32, #tpu.memory_space<vmem>>, %arg2: memref<32x256xbf16, #tpu.memory_space<vmem>>, %arg3: memref<1x256xf32, #tpu.memory_space<vmem>>, %arg4: memref<256x512xbf16, #tpu.memory_space<vmem>>, %arg5: memref<1x512xf32, #tpu.memory_space<vmem>>, %arg6: memref<512x896xbf16, #tpu.memory_space<vmem>>, %arg7: memref<1x896xf32, #tpu.memory_space<vmem>>, %arg8: memref<8x896xf32, #tpu.memory_space<vmem>>) attributes {dimension_semantics = [#tpu.dimension_semantics<parallel>], iteration_bounds = array<i64: 1>, scalar_prefetch = 0 : i64, scratch_operands = 0 : i64, tpu.core_type = #tpu.core_type<tc>, window_params = [{transform_indices = @transform_0, window_bounds = array<i64: 8, 32>}, {pipeline_mode = #tpu.pipeline_mode<synchronous>, transform_indices = @transform_1, window_bounds = array<i64: 32, 256>}, {pipeline_mode = #tpu.pipeline_mode<synchronous>, transform_indices = @transform_2, window_bounds = array<i64: 1, 256>}, {pipeline_mode = #tpu.pipeline_mode<synchronous>, transform_indices = @transform_3, window_bounds = array<i64: 256, 512>}, {pipeline_mode = #tpu.pipeline_mode<synchronous>, transform_indices = @transform_4, window_bounds = array<i64: 1, 512>}, {pipeline_mode = #tpu.pipeline_mode<synchronous>, transform_indices = @transform_5, window_bounds = array<i64: 512, 896>}, {pipeline_mode = #tpu.pipeline_mode<synchronous>, transform_indices = @transform_6, window_bounds = array<i64: 1, 896>}, {transform_indices = @transform_7, window_bounds = array<i64: 8, 896>}]} {
    %c0 = arith.constant 0 : index
    %c0_0 = arith.constant 0 : index
    %0 = vector.load %arg1[%c0, %c0_0] : memref<8x32xf32, #tpu.memory_space<vmem>>, vector<8x32xf32>
    %1 = arith.truncf %0 : vector<8x32xf32> to vector<8x32xbf16>
    %c0_1 = arith.constant 0 : index
    %c0_2 = arith.constant 0 : index
    %2 = vector.load %arg2[%c0_1, %c0_2] : memref<32x256xbf16, #tpu.memory_space<vmem>>, vector<32x256xbf16>
    %cst = arith.constant dense<0.000000e+00> : vector<8x256xf32>
    %3 = tpu.matmul %1, %2, %cst {dimension_numbers = #tpu.dot_dimension_numbers<[1], [0], [0], [1], [0, 0, 1, 1], [], []>} : vector<8x32xbf16>, vector<32x256xbf16>, vector<8x256xf32> -> vector<8x256xf32>
    %c0_3 = arith.constant 0 : index
    %c0_4 = arith.constant 0 : index
    %4 = vector.load %arg3[%c0_3, %c0_4] : memref<1x256xf32, #tpu.memory_space<vmem>>, vector<1x256xf32>
    %5 = vector.broadcast %4 : vector<1x256xf32> to vector<8x256xf32>
    %6 = arith.addf %3, %5 : vector<8x256xf32>
    %cst_5 = arith.constant 0.000000e+00 : f32
    %7 = vector.broadcast %cst_5 : f32 to vector<8x256xf32>
    %8 = arith.maximumf %6, %7 : vector<8x256xf32>
    %9 = arith.truncf %8 : vector<8x256xf32> to vector<8x256xbf16>
    %c0_6 = arith.constant 0 : index
    %c0_7 = arith.constant 0 : index
    %10 = vector.load %arg4[%c0_6, %c0_7] : memref<256x512xbf16, #tpu.memory_space<vmem>>, vector<256x512xbf16>
    %cst_8 = arith.constant dense<0.000000e+00> : vector<8x512xf32>
    %11 = tpu.matmul %9, %10, %cst_8 {dimension_numbers = #tpu.dot_dimension_numbers<[1], [0], [0], [1], [0, 0, 1, 1], [], []>} : vector<8x256xbf16>, vector<256x512xbf16>, vector<8x512xf32> -> vector<8x512xf32>
    %c0_9 = arith.constant 0 : index
    %c0_10 = arith.constant 0 : index
    %12 = vector.load %arg5[%c0_9, %c0_10] : memref<1x512xf32, #tpu.memory_space<vmem>>, vector<1x512xf32>
    %13 = vector.broadcast %12 : vector<1x512xf32> to vector<8x512xf32>
    %14 = arith.addf %11, %13 : vector<8x512xf32>
    %cst_11 = arith.constant 0.000000e+00 : f32
    %15 = vector.broadcast %cst_11 : f32 to vector<8x512xf32>
    %16 = arith.maximumf %14, %15 : vector<8x512xf32>
    %17 = arith.truncf %16 : vector<8x512xf32> to vector<8x512xbf16>
    %c0_12 = arith.constant 0 : index
    %c0_13 = arith.constant 0 : index
    %18 = vector.load %arg6[%c0_12, %c0_13] : memref<512x896xbf16, #tpu.memory_space<vmem>>, vector<512x896xbf16>
    %cst_14 = arith.constant dense<0.000000e+00> : vector<8x896xf32>
    %19 = tpu.matmul %17, %18, %cst_14 {dimension_numbers = #tpu.dot_dimension_numbers<[1], [0], [0], [1], [0, 0, 1, 1], [], []>} : vector<8x512xbf16>, vector<512x896xbf16>, vector<8x896xf32> -> vector<8x896xf32>
    %c0_15 = arith.constant 0 : index
    %c0_16 = arith.constant 0 : index
    %20 = vector.load %arg7[%c0_15, %c0_16] : memref<1x896xf32, #tpu.memory_space<vmem>>, vector<1x896xf32>
    %21 = vector.broadcast %20 : vector<1x896xf32> to vector<8x896xf32>
    %22 = arith.addf %19, %21 : vector<8x896xf32>
    %23 = arith.negf %22 : vector<8x896xf32>
    %24 = math.exp %23 : vector<8x896xf32>
    %cst_17 = arith.constant 1.000000e+00 : f32
    %25 = vector.broadcast %cst_17 : f32 to vector<8x896xf32>
    %26 = arith.addf %25, %24 : vector<8x896xf32>
    %27 = arith.divf %25, %26 : vector<8x896xf32>
    %c0_18 = arith.constant 0 : index
    %c0_19 = arith.constant 0 : index
    %28 = vector.load %arg8[%c0_18, %c0_19] : memref<8x896xf32, #tpu.memory_space<vmem>>, vector<8x896xf32>
    tpu.vector_store %arg8[%c0_18, %c0_19], %27 {strides = array<i32>} : memref<8x896xf32, #tpu.memory_space<vmem>>, vector<8x896xf32>,
    return
  }
  func.func @transform_0(%arg0: i32) -> (i32, i32) {
    %c0_i32 = arith.constant 0 : i32
    %c0_i32_0 = arith.constant 0 : i32
    return %arg0, %c0_i32 : i32, i32
  }
  func.func @transform_1(%arg0: i32) -> (i32, i32) {
    %c0_i32 = arith.constant 0 : i32
    %c0_i32_0 = arith.constant 0 : i32
    %c0_i32_1 = arith.constant 0 : i32
    return %c0_i32, %c0_i32_0 : i32, i32
  }
  func.func @transform_2(%arg0: i32) -> (i32, i32) {
    %c0_i32 = arith.constant 0 : i32
    %c0_i32_0 = arith.constant 0 : i32
    %c0_i32_1 = arith.constant 0 : i32
    return %c0_i32, %c0_i32_0 : i32, i32
  }
  func.func @transform_3(%arg0: i32) -> (i32, i32) {
    %c0_i32 = arith.constant 0 : i32
    %c0_i32_0 = arith.constant 0 : i32
    %c0_i32_1 = arith.constant 0 : i32
    return %c0_i32, %c0_i32_0 : i32, i32
  }
  func.func @transform_4(%arg0: i32) -> (i32, i32) {
    %c0_i32 = arith.constant 0 : i32
    %c0_i32_0 = arith.constant 0 : i32
    %c0_i32_1 = arith.constant 0 : i32
    return %c0_i32, %c0_i32_0 : i32, i32
  }
  func.func @transform_5(%arg0: i32) -> (i32, i32) {
    %c0_i32 = arith.constant 0 : i32
    %c0_i32_0 = arith.constant 0 : i32
    %c0_i32_1 = arith.constant 0 : i32
    return %c0_i32, %c0_i32_0 : i32, i32
  }
  func.func @transform_6(%arg0: i32) -> (i32, i32) {
    %c0_i32 = arith.constant 0 : i32
    %c0_i32_0 = arith.constant 0 : i32
    %c0_i32_1 = arith.constant 0 : i32
    return %c0_i32, %c0_i32_0 : i32, i32
  }
  func.func @transform_7(%arg0: i32) -> (i32, i32) {
    %c0_i32 = arith.constant 0 : i32
    %c0_i32_0 = arith.constant 0 : i32
    return %arg0, %c0_i32 : i32, i32
  }
}

</mosaic_0001>

<llo_original>
// kernel: decoder_forward.1
$region0: #{decoder_forward.1}
  #allocation0 [shape = 'u32[]', space=smem, size = 0x4, offset = 0x4, fixed_abs, tag = 'smem constant byte address 0x4 - core index']
  #allocation1 [shape = 'u32[144,128]{1,0:T(1,128)}', space=vmem, size = 0x12000, scoped, tag = 'internal scratch']
  %s0 = inlined_call_operand.vmem [shape: f32[8,32], index: 0, kind: input, shape index: {}]
  %s1 = inlined_call_operand.vmem [shape: bf16[32,256], index: 1, kind: input, shape index: {}]
  %s2 = inlined_call_operand.vmem [shape: f32[1,256], index: 2, kind: input, shape index: {}]
  %s3 = inlined_call_operand.vmem [shape: bf16[256,512], index: 3, kind: input, shape index: {}]
  %s4 = inlined_call_operand.vmem [shape: f32[1,512], index: 4, kind: input, shape index: {}]
  %s5 = inlined_call_operand.vmem [shape: bf16[512,896], index: 5, kind: input, shape index: {}]
  %s6 = inlined_call_operand.vmem [shape: f32[1,896], index: 6, kind: input, shape index: {}]
  %s7 = inlined_call_operand.vmem [shape: f32[8,896], index: 7, kind: output, shape index: {}]
  %s8 = sld [smem:[#allocation0]]
  $region38: #{decoder_forward.1} parent=0
    _
  %s10 = ssub.s32 1, %s8
  %s11 = scalar_select 0, %s10, %s8
  // Predicated region
  $region2: #{decoder_forward.1} parent=0 // pred_check
    _
  $region3: #{decoder_forward.1} parent=0 // pred_check_branch
    %13 = sbr.rel (0) target = $region5
  $region4: #{decoder_forward.1} parent=0 // pred_region
    _
  $region5: #{decoder_forward.1} parent=0 // pred_fallthru
    _
  // Predicated region
  $region6: #{decoder_forward.1} parent=0 // pred_check
    _
  $region7: #{decoder_forward.1} parent=0 // pred_check_branch
    %15 = sbr.rel (0) target = $region9
  $region8: #{decoder_forward.1} parent=0 // pred_region
    _
  $region9: #{decoder_forward.1} parent=0 // pred_fallthru
    _
  // Predicated region
  $region10: #{decoder_forward.1} parent=0 // pred_check
    _
  $region11: #{decoder_forward.1} parent=0 // pred_check_branch
    %17 = sbr.rel (0) target = $region13
  $region12: #{decoder_forward.1} parent=0 // pred_region
    _
  $region13: #{decoder_forward.1} parent=0 // pred_fallthru
    _
  // Predicated region
  $region14: #{decoder_forward.1} parent=0 // pred_check
    _
  $region15: #{decoder_forward.1} parent=0 // pred_check_branch
    %19 = sbr.rel (0) target = $region17
  $region16: #{decoder_forward.1} parent=0 // pred_region
    _
  $region17: #{decoder_forward.1} parent=0 // pred_fallthru
    _
  // Predicated region
  $region18: #{decoder_forward.1} parent=0 // pred_check
    _
  $region19: #{decoder_forward.1} parent=0 // pred_check_branch
    %21 = sbr.rel (0) target = $region21
  $region20: #{decoder_forward.1} parent=0 // pred_region
    _
  $region21: #{decoder_forward.1} parent=0 // pred_fallthru
    _
  // Predicated region
  $region22: #{decoder_forward.1} parent=0 // pred_check
    _
  $region23: #{decoder_forward.1} parent=0 // pred_check_branch
    %23 = sbr.rel (0) target = $region25
  $region24: #{decoder_forward.1} parent=0 // pred_region
    _
  $region25: #{decoder_forward.1} parent=0 // pred_fallthru
    _
  // Predicated region
  $region26: #{decoder_forward.1} parent=0 // pred_check
    _
  $region27: #{decoder_forward.1} parent=0 // pred_check_branch
    %25 = sbr.rel (0) target = $region29
  $region28: #{decoder_forward.1} parent=0 // pred_region
    _
  $region29: #{decoder_forward.1} parent=0 // pred_fallthru
    _
  %v27 = vld [vmem:[%s0] sm:$0xff]
  %v28 = vpack.c.bf16 %v27, %v27
  %v29 = vld [vmem:[%s1] sm:$0xff]
  %v30 = vld [vmem:[%s1 + $0x8] sm:$0xff]
  %v31 = vld [vmem:[%s1 + $0x10] sm:$0xff]
  %v32 = vld [vmem:[%s1 + $0x18] sm:$0xff]
  %v33 = vld [vmem:[%s2] sm:$0x3]
  %v35 = vlaneseq
  %v36 = vshrl.u32 %v35, 7
  %v37 = vsub.s32 0, %v36
  %v38 = vrot.slane %v33, %v37
  %v39 = vlaneseq
  %v40 = vshrl.u32 %v39, 7
  %v41 = vsub.s32 1, %v40
  %v42 = vrot.slane %v33, %v41
  %v49 = vunpack.c.l.b16 %v29
  %v50 = vunpack.c.h.b16 %v29
  %v51 = vunpack.c.l.b16 %v30
  %v52 = vunpack.c.h.b16 %v30
  %v53 = vunpack.c.l.b16 %v31
  %v54 = vunpack.c.h.b16 %v31
  %v55 = vunpack.c.l.b16 %v32
  %v56 = vunpack.c.h.b16 %v32
  %v57 = vpack.c.b16 %v51, %v49
  %v58 = vpack.c.b16 %v52, %v50
  %v59 = vpack.c.b16 %v55, %v53
  %v60 = vpack.c.b16 %v56, %v54
  %vm65 = vcmask 261120
  %v67 = vsel %vm65, %v28, 0
  %69 = vmatprep.subr.bf16.mxu0 %v58
  %70 = vmatpush1.bf16.msra.mxu0 %v57
  %71 = vmatprep.subr.bf16.mxu0 %v60
  %72 = vmatpush1.bf16.msra.mxu0 %v59
  %73 = vmatprep.subr.bf16.mxu0 0
  %74 = vmatpush1.bf16.msra.mxu0 0
  %75 = vmatprep.subr.bf16.mxu0 0
  %76 = vmatpush1.bf16.msra.mxu0 0
  %77 = vmatprep.subr.bf16.mxu0 0
  %78 = vmatpush1.bf16.msra.mxu0 0
  %79 = vmatprep.subr.bf16.mxu0 0
  %80 = vmatpush1.bf16.msra.mxu0 0
  %81 = vmatprep.subr.bf16.mxu0 0
  %82 = vmatpush1.bf16.msra.mxu0 0
  %83 = vmatprep.subr.bf16.mxu0 0
  %84 = vmatpush1.bf16.msra.mxu0 0
  %85 = vmatprep.subr.bf16.mxu0 0
  %86 = vmatpush1.bf16.msra.mxu0 0
  %87 = vmatprep.subr.bf16.mxu0 0
  %88 = vmatpush1.bf16.msra.mxu0 0
  %89 = vmatprep.subr.bf16.mxu0 0
  %90 = vmatpush1.bf16.msra.mxu0 0
  %91 = vmatprep.subr.bf16.mxu0 0
  %92 = vmatpush1.bf16.msra.mxu0 0
  %93 = vmatprep.subr.bf16.mxu0 0
  %94 = vmatpush1.bf16.msra.mxu0 0
  %95 = vmatprep.subr.bf16.mxu0 0
  %96 = vmatpush1.bf16.msra.mxu0 0
  %97 = vmatprep.subr.bf16.mxu0 0
  %98 = vmatpush1.bf16.msra.mxu0 0
  %99 = vmatprep.subr.bf16.mxu0 0
  %100 = vmatpush1.bf16.msra.mxu0 0
  %101 = vmatprep.mubr.bf16.mxu0 0
  %102 = vmatmul.mubr.bf16.gmra.mrb[0].mxu0 %v67
  %v103 = vpop.f32.mrb[0].mxu0
  %v104 = vadd.f32 %v38, %v103
  %v105 = vpop.f32.mrb[0].mxu0
  %v106 = vadd.f32 %v42, %v105
  %v107 = vpop.f32.mrb[0].mxu0
  %v108 = vpop.f32.mrb[0].mxu0
  %109 = vdwg.mxu0
  %v110 = vmax.f32 %v104, 0.0
  %v111 = vmax.f32 %v106, 0.0
  %v112 = vpack.c.bf16 %v110, %v110
  %v113 = vpack.c.bf16 %v111, %v111
  %v114 = vld [vmem:[%s3] sm:$0xff]
  %v115 = vld [vmem:[%s3 + $0x8] sm:$0xff]
  %v116 = vld [vmem:[%s3 + $0x10] sm:$0xff]
  %v117 = vld [vmem:[%s3 + $0x18] sm:$0xff]
  %v118 = vld [vmem:[%s3 + $0x20] sm:$0xff]
  %v119 = vld [vmem:[%s3 + $0x28] sm:$0xff]
  %v120 = vld [vmem:[%s3 + $0x30] sm:$0xff]
  %v121 = vld [vmem:[%s3 + $0x38] sm:$0xff]
  %v122 = vld [vmem:[%s3 + $0x40] sm:$0xff]
  %v123 = vld [vmem:[%s3 + $0x48] sm:$0xff]
  %v124 = vld [vmem:[%s3 + $0x50] sm:$0xff]
  %v125 = vld [vmem:[%s3 + $0x58] sm:$0xff]
  %v126 = vld [vmem:[%s3 + $0x60] sm:$0xff]
  %v127 = vld [vmem:[%s3 + $0x68] sm:$0xff]
  %v128 = vld [vmem:[%s3 + $0x70] sm:$0xff]
  %v129 = vld [vmem:[%s3 + $0x78] sm:$0xff]
  %v130 = vld [vmem:[%s3 + $0x80] sm:$0xff]
  %v131 = vld [vmem:[%s3 + $0x88] sm:$0xff]
  %v132 = vld [vmem:[%s3 + $0x90] sm:$0xff]
  %v133 = vld [vmem:[%s3 + $0x98] sm:$0xff]
  %v134 = vld [vmem:[%s3 + $0xa0] sm:$0xff]
  %v135 = vld [vmem:[%s3 + $0xa8] sm:$0xff]
  %v136 = vld [vmem:[%s3 + $0xb0] sm:$0xff]
  %v137 = vld [vmem:[%s3 + $0xb8] sm:$0xff]
  %v138 = vld [vmem:[%s3 + $0xc0] sm:$0xff]
  %v139 = vld [vmem:[%s3 + $0xc8] sm:$0xff]
  %v140 = vld [vmem:[%s3 + $0xd0] sm:$0xff]
  %v141 = vld [vmem:[%s3 + $0xd8] sm:$0xff]
  %v142 = vld [vmem:[%s3 + $0xe0] sm:$0xff]
  %v143 = vld [vmem:[%s3 + $0xe8] sm:$0xff]
  %v144 = vld [vmem:[%s3 + $0xf0] sm:$0xff]
  %v145 = vld [vmem:[%s3 + $0xf8] sm:$0xff]
  %v146 = vld [vmem:[%s3 + $0x100] sm:$0xff]
  %v147 = vld [vmem:[%s3 + $0x108] sm:$0xff]
  %v148 = vld [vmem:[%s3 + $0x110] sm:$0xff]
  %v149 = vld [vmem:[%s3 + $0x118] sm:$0xff]
  %v150 = vld [vmem:[%s3 + $0x120] sm:$0xff]
  %v151 = vld [vmem:[%s3 + $0x128] sm:$0xff]
  %v152 = vld [vmem:[%s3 + $0x130] sm:$0xff]
  %v153 = vld [vmem:[%s3 + $0x138] sm:$0xff]
  %v154 = vld [vmem:[%s3 + $0x140] sm:$0xff]
  %v155 = vld [vmem:[%s3 + $0x148] sm:$0xff]
  %v156 = vld [vmem:[%s3 + $0x150] sm:$0xff]
  %v157 = vld [vmem:[%s3 + $0x158] sm:$0xff]
  %v158 = vld [vmem:[%s3 + $0x160] sm:$0xff]
  %v159 = vld [vmem:[%s3 + $0x168] sm:$0xff]
  %v160 = vld [vmem:[%s3 + $0x170] sm:$0xff]
  %v161 = vld [vmem:[%s3 + $0x178] sm:$0xff]
  %v162 = vld [vmem:[%s3 + $0x180] sm:$0xff]
  %v163 = vld [vmem:[%s3 + $0x188] sm:$0xff]
  %v164 = vld [vmem:[%s3 + $0x190] sm:$0xff]
  %v165 = vld [vmem:[%s3 + $0x198] sm:$0xff]
  %v166 = vld [vmem:[%s3 + $0x1a0] sm:$0xff]
  %v167 = vld [vmem:[%s3 + $0x1a8] sm:$0xff]
  %v168 = vld [vmem:[%s3 + $0x1b0] sm:$0xff]
  %v169 = vld [vmem:[%s3 + $0x1b8] sm:$0xff]
  %v170 = vld [vmem:[%s3 + $0x1c0] sm:$0xff]
  %v171 = vld [vmem:[%s3 + $0x1c8] sm:$0xff]
  %v172 = vld [vmem:[%s3 + $0x1d0] sm:$0xff]
  %v173 = vld [vmem:[%s3 + $0x1d8] sm:$0xff]
  %v174 = vld [vmem:[%s3 + $0x1e0] sm:$0xff]
  %v175 = vld [vmem:[%s3 + $0x1e8] sm:$0xff]
  %v176 = vld [vmem:[%s3 + $0x1f0] sm:$0xff]
  %v177 = vld [vmem:[%s3 + $0x1f8] sm:$0xff]
  %v178 = vld [vmem:[%s4] sm:$0xf]
  %v180 = vlaneseq
  %v181 = vshrl.u32 %v180, 7
  %v182 = vsub.s32 0, %v181
  %v183 = vrot.slane %v178, %v182
  %v184 = vlaneseq
  %v185 = vshrl.u32 %v184, 7
  %v186 = vsub.s32 1, %v185
  %v187 = vrot.slane %v178, %v186
  %v188 = vlaneseq
  %v189 = vshrl.u32 %v188, 7
  %v190 = vsub.s32 2, %v189
  %v191 = vrot.slane %v178, %v190
  %v192 = vlaneseq
  %v193 = vshrl.u32 %v192, 7
  %v194 = vsub.s32 3, %v193
  %v195 = vrot.slane %v178, %v194
  %v264 = vunpack.c.l.b16 %v114
  %v265 = vunpack.c.h.b16 %v114
  %v266 = vunpack.c.l.b16 %v115
  %v267 = vunpack.c.h.b16 %v115
  %v268 = vunpack.c.l.b16 %v116
  %v269 = vunpack.c.h.b16 %v116
  %v270 = vunpack.c.l.b16 %v117
  %v271 = vunpack.c.h.b16 %v117
  %v272 = vunpack.c.l.b16 %v118
  %v273 = vunpack.c.h.b16 %v118
  %v274 = vunpack.c.l.b16 %v119
  %v275 = vunpack.c.h.b16 %v119
  %v276 = vunpack.c.l.b16 %v120
  %v277 = vunpack.c.h.b16 %v120
  %v278 = vunpack.c.l.b16 %v121
  %v279 = vunpack.c.h.b16 %v121
  %v280 = vunpack.c.l.b16 %v122
  %v281 = vunpack.c.h.b16 %v122
  %v282 = vunpack.c.l.b16 %v123
  %v283 = vunpack.c.h.b16 %v123
  %v284 = vunpack.c.l.b16 %v124
  %v285 = vunpack.c.h.b16 %v124
  %v286 = vunpack.c.l.b16 %v125
  %v287 = vunpack.c.h.b16 %v125
  %v288 = vunpack.c.l.b16 %v126
  %v289 = vunpack.c.h.b16 %v126
  %v290 = vunpack.c.l.b16 %v127
  %v291 = vunpack.c.h.b16 %v127
  %v292 = vunpack.c.l.b16 %v128
  %v293 = vunpack.c.h.b16 %v128
  %v294 = vunpack.c.l.b16 %v129
  %v295 = vunpack.c.h.b16 %v129
  %v296 = vunpack.c.l.b16 %v130
  %v297 = vunpack.c.h.b16 %v130
  %v298 = vunpack.c.l.b16 %v131
  %v299 = vunpack.c.h.b16 %v131
  %v300 = vunpack.c.l.b16 %v132
  %v301 = vunpack.c.h.b16 %v132
  %v302 = vunpack.c.l.b16 %v133
  %v303 = vunpack.c.h.b16 %v133
  %v304 = vunpack.c.l.b16 %v134
  %v305 = vunpack.c.h.b16 %v134
  %v306 = vunpack.c.l.b16 %v135
  %v307 = vunpack.c.h.b16 %v135
  %v308 = vunpack.c.l.b16 %v136
  %v309 = vunpack.c.h.b16 %v136
  %v310 = vunpack.c.l.b16 %v137
  %v311 = vunpack.c.h.b16 %v137
  %v312 = vunpack.c.l.b16 %v138
  %v313 = vunpack.c.h.b16 %v138
  %v314 = vunpack.c.l.b16 %v139
  %v315 = vunpack.c.h.b16 %v139
  %v316 = vunpack.c.l.b16 %v140
  %v317 = vunpack.c.h.b16 %v140
  %v318 = vunpack.c.l.b16 %v141
  %v319 = vunpack.c.h.b16 %v141
  %v320 = vunpack.c.l.b16 %v142
  %v321 = vunpack.c.h.b16 %v142
  %v322 = vunpack.c.l.b16 %v143
  %v323 = vunpack.c.h.b16 %v143
  %v324 = vunpack.c.l.b16 %v144
  %v325 = vunpack.c.h.b16 %v144
  %v326 = vunpack.c.l.b16 %v145
  %v327 = vunpack.c.h.b16 %v145
  %v328 = vunpack.c.l.b16 %v146
  %v329 = vunpack.c.h.b16 %v146
  %v330 = vunpack.c.l.b16 %v147
  %v331 = vunpack.c.h.b16 %v147
  %v332 = vunpack.c.l.b16 %v148
  %v333 = vunpack.c.h.b16 %v148
  %v334 = vunpack.c.l.b16 %v149
  %v335 = vunpack.c.h.b16 %v149
  %v336 = vunpack.c.l.b16 %v150
  %v337 = vunpack.c.h.b16 %v150
  %v338 = vunpack.c.l.b16 %v151
  %v339 = vunpack.c.h.b16 %v151
  %v340 = vunpack.c.l.b16 %v152
  %v341 = vunpack.c.h.b16 %v152
  %v342 = vunpack.c.l.b16 %v153
  %v343 = vunpack.c.h.b16 %v153
  %v344 = vunpack.c.l.b16 %v154
  %v345 = vunpack.c.h.b16 %v154
  %v346 = vunpack.c.l.b16 %v155
  %v347 = vunpack.c.h.b16 %v155
  %v348 = vunpack.c.l.b16 %v156
  %v349 = vunpack.c.h.b16 %v156
  %v350 = vunpack.c.l.b16 %v157
  %v351 = vunpack.c.h.b16 %v157
  %v352 = vunpack.c.l.b16 %v158
  %v353 = vunpack.c.h.b16 %v158
  %v354 = vunpack.c.l.b16 %v159
  %v355 = vunpack.c.h.b16 %v159
  %v356 = vunpack.c.l.b16 %v160
  %v357 = vunpack.c.h.b16 %v160
  %v358 = vunpack.c.l.b16 %v161
  %v359 = vunpack.c.h.b16 %v161
  %v360 = vunpack.c.l.b16 %v162
  %v361 = vunpack.c.h.b16 %v162
  %v362 = vunpack.c.l.b16 %v163
  %v363 = vunpack.c.h.b16 %v163
  %v364 = vunpack.c.l.b16 %v164
  %v365 = vunpack.c.h.b16 %v164
  %v366 = vunpack.c.l.b16 %v165
  %v367 = vunpack.c.h.b16 %v165
  %v368 = vunpack.c.l.b16 %v166
  %v369 = vunpack.c.h.b16 %v166
  %v370 = vunpack.c.l.b16 %v167
  %v371 = vunpack.c.h.b16 %v167
  %v372 = vunpack.c.l.b16 %v168
  %v373 = vunpack.c.h.b16 %v168
  %v374 = vunpack.c.l.b16 %v169
  %v375 = vunpack.c.h.b16 %v169
  %v376 = vunpack.c.l.b16 %v170
  %v377 = vunpack.c.h.b16 %v170
  %v378 = vunpack.c.l.b16 %v171
  %v379 = vunpack.c.h.b16 %v171
  %v380 = vunpack.c.l.b16 %v172
  %v381 = vunpack.c.h.b16 %v172
  %v382 = vunpack.c.l.b16 %v173
  %v383 = vunpack.c.h.b16 %v173
  %v384 = vunpack.c.l.b16 %v174
  %v385 = vunpack.c.h.b16 %v174
  %v386 = vunpack.c.l.b16 %v175
  %v387 = vunpack.c.h.b16 %v175
  %v388 = vunpack.c.l.b16 %v176
  %v389 = vunpack.c.h.b16 %v176
  %v390 = vunpack.c.l.b16 %v177
  %v391 = vunpack.c.h.b16 %v177
  %v392 = vpack.c.b16 %v268, %v264
  %v393 = vpack.c.b16 %v269, %v265
  %v394 = vpack.c.b16 %v270, %v266
  %v395 = vpack.c.b16 %v271, %v267
  %v396 = vpack.c.b16 %v276, %v272
  %v397 = vpack.c.b16 %v277, %v273
  %v398 = vpack.c.b16 %v278, %v274
  %v399 = vpack.c.b16 %v279, %v275
  %v400 = vpack.c.b16 %v284, %v280
  %v401 = vpack.c.b16 %v285, %v281
  %v402 = vpack.c.b16 %v286, %v282
  %v403 = vpack.c.b16 %v287, %v283
  %v404 = vpack.c.b16 %v292, %v288
  %v405 = vpack.c.b16 %v293, %v289
  %v406 = vpack.c.b16 %v294, %v290
  %v407 = vpack.c.b16 %v295, %v291
  %v408 = vpack.c.b16 %v300, %v296
  %v409 = vpack.c.b16 %v301, %v297
  %v410 = vpack.c.b16 %v302, %v298
  %v411 = vpack.c.b16 %v303, %v299
  %v412 = vpack.c.b16 %v308, %v304
  %v413 = vpack.c.b16 %v309, %v305
  %v414 = vpack.c.b16 %v310, %v306
  %v415 = vpack.c.b16 %v311, %v307
  %v416 = vpack.c.b16 %v316, %v312
  %v417 = vpack.c.b16 %v317, %v313
  %v418 = vpack.c.b16 %v318, %v314
  %v419 = vpack.c.b16 %v319, %v315
  %v420 = vpack.c.b16 %v324, %v320
  %v421 = vpack.c.b16 %v325, %v321
  %v422 = vpack.c.b16 %v326, %v322
  %v423 = vpack.c.b16 %v327, %v323
  %v424 = vpack.c.b16 %v332, %v328
  %v425 = vpack.c.b16 %v333, %v329
  %v426 = vpack.c.b16 %v334, %v330
  %v427 = vpack.c.b16 %v335, %v331
  %v428 = vpack.c.b16 %v340, %v336
  %v429 = vpack.c.b16 %v341, %v337
  %v430 = vpack.c.b16 %v342, %v338
  %v431 = vpack.c.b16 %v343, %v339
  %v432 = vpack.c.b16 %v348, %v344
  %v433 = vpack.c.b16 %v349, %v345
  %v434 = vpack.c.b16 %v350, %v346
  %v435 = vpack.c.b16 %v351, %v347
  %v436 = vpack.c.b16 %v356, %v352
  %v437 = vpack.c.b16 %v357, %v353
  %v438 = vpack.c.b16 %v358, %v354
  %v439 = vpack.c.b16 %v359, %v355
  %v440 = vpack.c.b16 %v364, %v360
  %v441 = vpack.c.b16 %v365, %v361
  %v442 = vpack.c.b16 %v366, %v362
  %v443 = vpack.c.b16 %v367, %v363
  %v444 = vpack.c.b16 %v372, %v368
  %v445 = vpack.c.b16 %v373, %v369
  %v446 = vpack.c.b16 %v374, %v370
  %v447 = vpack.c.b16 %v375, %v371
  %v448 = vpack.c.b16 %v380, %v376
  %v449 = vpack.c.b16 %v381, %v377
  %v450 = vpack.c.b16 %v382, %v378
  %v451 = vpack.c.b16 %v383, %v379
  %v452 = vpack.c.b16 %v388, %v384
  %v453 = vpack.c.b16 %v389, %v385
  %v454 = vpack.c.b16 %v390, %v386
  %v455 = vpack.c.b16 %v391, %v387
  %520 = vmatprep.subr.bf16.mxu0 %v393
  %521 = vmatpush1.bf16.msra.mxu0 %v392
  %522 = vmatprep.subr.bf16.mxu0 %v397
  %523 = vmatpush1.bf16.msra.mxu0 %v396
  %524 = vmatprep.subr.bf16.mxu0 %v401
  %525 = vmatpush1.bf16.msra.mxu0 %v400
  %526 = vmatprep.subr.bf16.mxu0 %v405
  %527 = vmatpush1.bf16.msra.mxu0 %v404
  %528 = vmatprep.subr.bf16.mxu0 %v409
  %529 = vmatpush1.bf16.msra.mxu0 %v408
  %530 = vmatprep.subr.bf16.mxu0 %v413
  %531 = vmatpush1.bf16.msra.mxu0 %v412
  %532 = vmatprep.subr.bf16.mxu0 %v417
  %533 = vmatpush1.bf16.msra.mxu0 %v416
  %534 = vmatprep.subr.bf16.mxu0 %v421
  %535 = vmatpush1.bf16.msra.mxu0 %v420
  %536 = vmatprep.subr.bf16.mxu0 %v425
  %537 = vmatpush1.bf16.msra.mxu0 %v424
  %538 = vmatprep.subr.bf16.mxu0 %v429
  %539 = vmatpush1.bf16.msra.mxu0 %v428
  %540 = vmatprep.subr.bf16.mxu0 %v433
  %541 = vmatpush1.bf16.msra.mxu0 %v432
  %542 = vmatprep.subr.bf16.mxu0 %v437
  %543 = vmatpush1.bf16.msra.mxu0 %v436
  %544 = vmatprep.subr.bf16.mxu0 %v441
  %545 = vmatpush1.bf16.msra.mxu0 %v440
  %546 = vmatprep.subr.bf16.mxu0 %v445
  %547 = vmatpush1.bf16.msra.mxu0 %v444
  %548 = vmatprep.subr.bf16.mxu0 %v449
  %549 = vmatpush1.bf16.msra.mxu0 %v448
  %550 = vmatprep.subr.bf16.mxu0 %v453
  %551 = vmatpush1.bf16.msra.mxu0 %v452
  %552 = vmatprep.mubr.bf16.mxu0 %v113
  %553 = vmatmul.mubr.bf16.gmra.mrb[0].mxu0 %v112
  %v554 = vpop.f32.mrb[0].mxu0
  %v555 = vadd.f32 %v183, %v554
  %v556 = vpop.f32.mrb[0].mxu0
  %v557 = vadd.f32 %v187, %v556
  %v558 = vpop.f32.mrb[0].mxu0
  %v559 = vpop.f32.mrb[0].mxu0
  %560 = vdwg.mxu0
  %561 = vmatprep.subr.bf16.mxu0 %v395
  %562 = vmatpush1.bf16.msra.mxu0 %v394
  %563 = vmatprep.subr.bf16.mxu0 %v399
  %564 = vmatpush1.bf16.msra.mxu0 %v398
  %565 = vmatprep.subr.bf16.mxu0 %v403
  %566 = vmatpush1.bf16.msra.mxu0 %v402
  %567 = vmatprep.subr.bf16.mxu0 %v407
  %568 = vmatpush1.bf16.msra.mxu0 %v406
  %569 = vmatprep.subr.bf16.mxu0 %v411
  %570 = vmatpush1.bf16.msra.mxu0 %v410
  %571 = vmatprep.subr.bf16.mxu0 %v415
  %572 = vmatpush1.bf16.msra.mxu0 %v414
  %573 = vmatprep.subr.bf16.mxu0 %v419
  %574 = vmatpush1.bf16.msra.mxu0 %v418
  %575 = vmatprep.subr.bf16.mxu0 %v423
  %576 = vmatpush1.bf16.msra.mxu0 %v422
  %577 = vmatprep.subr.bf16.mxu0 %v427
  %578 = vmatpush1.bf16.msra.mxu0 %v426
  %579 = vmatprep.subr.bf16.mxu0 %v431
  %580 = vmatpush1.bf16.msra.mxu0 %v430
  %581 = vmatprep.subr.bf16.mxu0 %v435
  %582 = vmatpush1.bf16.msra.mxu0 %v434
  %583 = vmatprep.subr.bf16.mxu0 %v439
  %584 = vmatpush1.bf16.msra.mxu0 %v438
  %585 = vmatprep.subr.bf16.mxu0 %v443
  %586 = vmatpush1.bf16.msra.mxu0 %v442
  %587 = vmatprep.subr.bf16.mxu0 %v447
  %588 = vmatpush1.bf16.msra.mxu0 %v446
  %589 = vmatprep.subr.bf16.mxu0 %v451
  %590 = vmatpush1.bf16.msra.mxu0 %v450
  %591 = vmatprep.subr.bf16.mxu0 %v455
  %592 = vmatpush1.bf16.msra.mxu0 %v454
  %593 = vmatprep.mubr.bf16.mxu0 %v113
  %594 = vmatmul.mubr.bf16.gmra.mrb[0].mxu0 %v112
  %v595 = vpop.f32.mrb[0].mxu0
  %v596 = vadd.f32 %v191, %v595
  %v597 = vpop.f32.mrb[0].mxu0
  %v598 = vadd.f32 %v195, %v597
  %v599 = vpop.f32.mrb[0].mxu0
  %v600 = vpop.f32.mrb[0].mxu0
  %601 = vdwg.mxu0
  %v602 = vmax.f32 %v555, 0.0
  %v603 = vmax.f32 %v557, 0.0
  %v604 = vmax.f32 %v596, 0.0
  %v605 = vmax.f32 %v598, 0.0
  %v606 = vpack.c.bf16 %v602, %v602
  %v607 = vpack.c.bf16 %v603, %v603
  %v608 = vpack.c.bf16 %v604, %v604
  %v609 = vpack.c.bf16 %v605, %v605
  %v610 = vld [vmem:[%s5] sm:$0xff]
  %v611 = vld [vmem:[%s5 + $0x8] sm:$0xff]
  %v612 = vld [vmem:[%s5 + $0x10] sm:$0xff]
  %v613 = vld [vmem:[%s5 + $0x18] sm:$0xf]
  %v614 = vld [vmem:[%s5 + $0x1c] sm:$0xff]
  %v615 = vld [vmem:[%s5 + $0x24] sm:$0xff]
  %v616 = vld [vmem:[%s5 + $0x2c] sm:$0xff]
  %v617 = vld [vmem:[%s5 + $0x34] sm:$0xf]
  %v618 = vld [vmem:[%s5 + $0x38] sm:$0xff]
  %v619 = vld [vmem:[%s5 + $0x40] sm:$0xff]
  %v620 = vld [vmem:[%s5 + $0x48] sm:$0xff]
  %v621 = vld [vmem:[%s5 + $0x50] sm:$0xf]
  %v622 = vld [vmem:[%s5 + $0x54] sm:$0xff]
  %v623 = vld [vmem:[%s5 + $0x5c] sm:$0xff]
  %v624 = vld [vmem:[%s5 + $0x64] sm:$0xff]
  %v625 = vld [vmem:[%s5 + $0x6c] sm:$0xf]
  %v626 = vld [vmem:[%s5 + $0x70] sm:$0xff]
  %v627 = vld [vmem:[%s5 + $0x78] sm:$0xff]
  %v628 = vld [vmem:[%s5 + $0x80] sm:$0xff]
  %v629 = vld [vmem:[%s5 + $0x88] sm:$0xf]
  %v630 = vld [vmem:[%s5 + $0x8c] sm:$0xff]
  %v631 = vld [vmem:[%s5 + $0x94] sm:$0xff]
  %v632 = vld [vmem:[%s5 + $0x9c] sm:$0xff]
  %v633 = vld [vmem:[%s5 + $0xa4] sm:$0xf]
  %v634 = vld [vmem:[%s5 + $0xa8] sm:$0xff]
  %v635 = vld [vmem:[%s5 + $0xb0] sm:$0xff]
  %v636 = vld [vmem:[%s5 + $0xb8] sm:$0xff]
  %v637 = vld [vmem:[%s5 + $0xc0] sm:$0xf]
  %v638 = vld [vmem:[%s5 + $0xc4] sm:$0xff]
  %v639 = vld [vmem:[%s5 + $0xcc] sm:$0xff]
  %v640 = vld [vmem:[%s5 + $0xd4] sm:$0xff]
  %v641 = vld [vmem:[%s5 + $0xdc] sm:$0xf]
  %v642 = vld [vmem:[%s5 + $0xe0] sm:$0xff]
  %v643 = vld [vmem:[%s5 + $0xe8] sm:$0xff]
  %v644 = vld [vmem:[%s5 + $0xf0] sm:$0xff]
  %v645 = vld [vmem:[%s5 + $0xf8] sm:$0xf]
  %v646 = vld [vmem:[%s5 + $0xfc] sm:$0xff]
  %v647 = vld [vmem:[%s5 + $0x104] sm:$0xff]
  %v648 = vld [vmem:[%s5 + $0x10c] sm:$0xff]
  %v649 = vld [vmem:[%s5 + $0x114] sm:$0xf]
  %v650 = vld [vmem:[%s5 + $0x118] sm:$0xff]
  %v651 = vld [vmem:[%s5 + $0x120] sm:$0xff]
  %v652 = vld [vmem:[%s5 + $0x128] sm:$0xff]
  %v653 = vld [vmem:[%s5 + $0x130] sm:$0xf]
  %v654 = vld [vmem:[%s5 + $0x134] sm:$0xff]
  %v655 = vld [vmem:[%s5 + $0x13c] sm:$0xff]
  %v656 = vld [vmem:[%s5 + $0x144] sm:$0xff]
  %v657 = vld [vmem:[%s5 + $0x14c] sm:$0xf]
  %v658 = vld [vmem:[%s5 + $0x150] sm:$0xff]
  %v659 = vld [vmem:[%s5 + $0x158] sm:$0xff]
  %v660 = vld [vmem:[%s5 + $0x160] sm:$0xff]
  %v661 = vld [vmem:[%s5 + $0x168] sm:$0xf]
  %v662 = vld [vmem:[%s5 + $0x16c] sm:$0xff]
  %v663 = vld [vmem:[%s5 + $0x174] sm:$0xff]
  %v664 = vld [vmem:[%s5 + $0x17c] sm:$0xff]
  %v665 = vld [vmem:[%s5 + $0x184] sm:$0xf]
  %v666 = vld [vmem:[%s5 + $0x188] sm:$0xff]
  %v667 = vld [vmem:[%s5 + $0x190] sm:$0xff]
  %v668 = vld [vmem:[%s5 + $0x198] sm:$0xff]
  %v669 = vld [vmem:[%s5 + $0x1a0] sm:$0xf]
  %v670 = vld [vmem:[%s5 + $0x1a4] sm:$0xff]
  %v671 = vld [vmem:[%s5 + $0x1ac] sm:$0xff]
  %v672 = vld [vmem:[%s5 + $0x1b4] sm:$0xff]
  %v673 = vld [vmem:[%s5 + $0x1bc] sm:$0xf]
  %v674 = vld [vmem:[%s5 + $0x1c0] sm:$0xff]
  %v675 = vld [vmem:[%s5 + $0x1c8] sm:$0xff]
  %v676 = vld [vmem:[%s5 + $0x1d0] sm:$0xff]
  %v677 = vld [vmem:[%s5 + $0x1d8] sm:$0xf]
  %v678 = vld [vmem:[%s5 + $0x1dc] sm:$0xff]
  %v679 = vld [vmem:[%s5 + $0x1e4] sm:$0xff]
  %v680 = vld [vmem:[%s5 + $0x1ec] sm:$0xff]
  %v681 = vld [vmem:[%s5 + $0x1f4] sm:$0xf]
  %v682 = vld [vmem:[%s5 + $0x1f8] sm:$0xff]
  %v683 = vld [vmem:[%s5 + $0x200] sm:$0xff]
  %v684 = vld [vmem:[%s5 + $0x208] sm:$0xff]
  %v685 = vld [vmem:[%s5 + $0x210] sm:$0xf]
  %v686 = vld [vmem:[%s5 + $0x214] sm:$0xff]
  %v687 = vld [vmem:[%s5 + $0x21c] sm:$0xff]
  %v688 = vld [vmem:[%s5 + $0x224] sm:$0xff]
  %v689 = vld [vmem:[%s5 + $0x22c] sm:$0xf]
  %v690 = vld [vmem:[%s5 + $0x230] sm:$0xff]
  %v691 = vld [vmem:[%s5 + $0x238] sm:$0xff]
  %v692 = vld [vmem:[%s5 + $0x240] sm:$0xff]
  %v693 = vld [vmem:[%s5 + $0x248] sm:$0xf]
  %v694 = vld [vmem:[%s5 + $0x24c] sm:$0xff]
  %v695 = vld [vmem:[%s5 + $0x254] sm:$0xff]
  %v696 = vld [vmem:[%s5 + $0x25c] sm:$0xff]
  %v697 = vld [vmem:[%s5 + $0x264] sm:$0xf]
  %v698 = vld [vmem:[%s5 + $0x268] sm:$0xff]
  %v699 = vld [vmem:[%s5 + $0x270] sm:$0xff]
  %v700 = vld [vmem:[%s5 + $0x278] sm:$0xff]
  %v701 = vld [vmem:[%s5 + $0x280] sm:$0xf]
  %v702 = vld [vmem:[%s5 + $0x284] sm:$0xff]
  %v703 = vld [vmem:[%s5 + $0x28c] sm:$0xff]
  %v704 = vld [vmem:[%s5 + $0x294] sm:$0xff]
  %v705 = vld [vmem:[%s5 + $0x29c] sm:$0xf]
  %v706 = vld [vmem:[%s5 + $0x2a0] sm:$0xff]
  %v707 = vld [vmem:[%s5 + $0x2a8] sm:$0xff]
  %v708 = vld [vmem:[%s5 + $0x2b0] sm:$0xff]
  %v709 = vld [vmem:[%s5 + $0x2b8] sm:$0xf]
  %v710 = vld [vmem:[%s5 + $0x2bc] sm:$0xff]
  %v711 = vld [vmem:[%s5 + $0x2c4] sm:$0xff]
  %v712 = vld [vmem:[%s5 + $0x2cc] sm:$0xff]
  %v713 = vld [vmem:[%s5 + $0x2d4] sm:$0xf]
  %v714 = vld [vmem:[%s5 + $0x2d8] sm:$0xff]
  %v715 = vld [vmem:[%s5 + $0x2e0] sm:$0xff]
  %v716 = vld [vmem:[%s5 + $0x2e8] sm:$0xff]
  %v717 = vld [vmem:[%s5 + $0x2f0] sm:$0xf]
  %v718 = vld [vmem:[%s5 + $0x2f4] sm:$0xff]
  %v719 = vld [vmem:[%s5 + $0x2fc] sm:$0xff]
  %v720 = vld [vmem:[%s5 + $0x304] sm:$0xff]
  %v721 = vld [vmem:[%s5 + $0x30c] sm:$0xf]
  %v722 = vld [vmem:[%s5 + $0x310] sm:$0xff]
  %v723 = vld [vmem:[%s5 + $0x318] sm:$0xff]
  %v724 = vld [vmem:[%s5 + $0x320] sm:$0xff]
  %v725 = vld [vmem:[%s5 + $0x328] sm:$0xf]
  %v726 = vld [vmem:[%s5 + $0x32c] sm:$0xff]
  %v727 = vld [vmem:[%s5 + $0x334] sm:$0xff]
  %v728 = vld [vmem:[%s5 + $0x33c] sm:$0xff]
  %v729 = vld [vmem:[%s5 + $0x344] sm:$0xf]
  %v730 = vld [vmem:[%s5 + $0x348] sm:$0xff]
  %v731 = vld [vmem:[%s5 + $0x350] sm:$0xff]
  %v732 = vld [vmem:[%s5 + $0x358] sm:$0xff]
  %v733 = vld [vmem:[%s5 + $0x360] sm:$0xf]
  %v734 = vld [vmem:[%s5 + $0x364] sm:$0xff]
  %v735 = vld [vmem:[%s5 + $0x36c] sm:$0xff]
  %v736 = vld [vmem:[%s5 + $0x374] sm:$0xff]
  %v737 = vld [vmem:[%s5 + $0x37c] sm:$0xf]
  %v738 = vld [vmem:[%s5 + $0x380] sm:$0xff]
  %v739 = vld [vmem:[%s5 + $0x388] sm:$0xff]
  %v740 = vld [vmem:[%s5 + $0x390] sm:$0xff]
  %v741 = vld [vmem:[%s5 + $0x398] sm:$0xf]
  %v742 = vld [vmem:[%s5 + $0x39c] sm:$0xff]
  %v743 = vld [vmem:[%s5 + $0x3a4] sm:$0xff]
  %v744 = vld [vmem:[%s5 + $0x3ac] sm:$0xff]
  %v745 = vld [vmem:[%s5 + $0x3b4] sm:$0xf]
  %v746 = vld [vmem:[%s5 + $0x3b8] sm:$0xff]
  %v747 = vld [vmem:[%s5 + $0x3c0] sm:$0xff]
  %v748 = vld [vmem:[%s5 + $0x3c8] sm:$0xff]
  %v749 = vld [vmem:[%s5 + $0x3d0] sm:$0xf]
  %v750 = vld [vmem:[%s5 + $0x3d4] sm:$0xff]
  %v751 = vld [vmem:[%s5 + $0x3dc] sm:$0xff]
  %v752 = vld [vmem:[%s5 + $0x3e4] sm:$0xff]
  %v753 = vld [vmem:[%s5 + $0x3ec] sm:$0xf]
  %v754 = vld [vmem:[%s5 + $0x3f0] sm:$0xff]
  %v755 = vld [vmem:[%s5 + $0x3f8] sm:$0xff]
  %v756 = vld [vmem:[%s5 + $0x400] sm:$0xff]
  %v757 = vld [vmem:[%s5 + $0x408] sm:$0xf]
  %v758 = vld [vmem:[%s5 + $0x40c] sm:$0xff]
  %v759 = vld [vmem:[%s5 + $0x414] sm:$0xff]
  %v760 = vld [vmem:[%s5 + $0x41c] sm:$0xff]
  %v761 = vld [vmem:[%s5 + $0x424] sm:$0xf]
  %v762 = vld [vmem:[%s5 + $0x428] sm:$0xff]
  %v763 = vld [vmem:[%s5 + $0x430] sm:$0xff]
  %v764 = vld [vmem:[%s5 + $0x438] sm:$0xff]
  %v765 = vld [vmem:[%s5 + $0x440] sm:$0xf]
  %v766 = vld [vmem:[%s5 + $0x444] sm:$0xff]
  %v767 = vld [vmem:[%s5 + $0x44c] sm:$0xff]
  %v768 = vld [vmem:[%s5 + $0x454] sm:$0xff]
  %v769 = vld [vmem:[%s5 + $0x45c] sm:$0xf]
  %v770 = vld [vmem:[%s5 + $0x460] sm:$0xff]
  %v771 = vld [vmem:[%s5 + $0x468] sm:$0xff]
  %v772 = vld [vmem:[%s5 + $0x470] sm:$0xff]
  %v773 = vld [vmem:[%s5 + $0x478] sm:$0xf]
  %v774 = vld [vmem:[%s5 + $0x47c] sm:$0xff]
  %v775 = vld [vmem:[%s5 + $0x484] sm:$0xff]
  %v776 = vld [vmem:[%s5 + $0x48c] sm:$0xff]
  %v777 = vld [vmem:[%s5 + $0x494] sm:$0xf]
  %v778 = vld [vmem:[%s5 + $0x498] sm:$0xff]
  %v779 = vld [vmem:[%s5 + $0x4a0] sm:$0xff]
  %v780 = vld [vmem:[%s5 + $0x4a8] sm:$0xff]
  %v781 = vld [vmem:[%s5 + $0x4b0] sm:$0xf]
  %v782 = vld [vmem:[%s5 + $0x4b4] sm:$0xff]
  %v783 = vld [vmem:[%s5 + $0x4bc] sm:$0xff]
  %v784 = vld [vmem:[%s5 + $0x4c4] sm:$0xff]
  %v785 = vld [vmem:[%s5 + $0x4cc] sm:$0xf]
  %v786 = vld [vmem:[%s5 + $0x4d0] sm:$0xff]
  %v787 = vld [vmem:[%s5 + $0x4d8] sm:$0xff]
  %v788 = vld [vmem:[%s5 + $0x4e0] sm:$0xff]
  %v789 = vld [vmem:[%s5 + $0x4e8] sm:$0xf]
  %v790 = vld [vmem:[%s5 + $0x4ec] sm:$0xff]
  %v791 = vld [vmem:[%s5 + $0x4f4] sm:$0xff]
  %v792 = vld [vmem:[%s5 + $0x4fc] sm:$0xff]
  %v793 = vld [vmem:[%s5 + $0x504] sm:$0xf]
  %v794 = vld [vmem:[%s5 + $0x508] sm:$0xff]
  %v795 = vld [vmem:[%s5 + $0x510] sm:$0xff]
  %v796 = vld [vmem:[%s5 + $0x518] sm:$0xff]
  %v797 = vld [vmem:[%s5 + $0x520] sm:$0xf]
  %v798 = vld [vmem:[%s5 + $0x524] sm:$0xff]
  %v799 = vld [vmem:[%s5 + $0x52c] sm:$0xff]
  %v800 = vld [vmem:[%s5 + $0x534] sm:$0xff]
  %v801 = vld [vmem:[%s5 + $0x53c] sm:$0xf]
  %v802 = vld [vmem:[%s5 + $0x540] sm:$0xff]
  %v803 = vld [vmem:[%s5 + $0x548] sm:$0xff]
  %v804 = vld [vmem:[%s5 + $0x550] sm:$0xff]
  %v805 = vld [vmem:[%s5 + $0x558] sm:$0xf]
  %v806 = vld [vmem:[%s5 + $0x55c] sm:$0xff]
  %v807 = vld [vmem:[%s5 + $0x564] sm:$0xff]
  %v808 = vld [vmem:[%s5 + $0x56c] sm:$0xff]
  %v809 = vld [vmem:[%s5 + $0x574] sm:$0xf]
  %v810 = vld [vmem:[%s5 + $0x578] sm:$0xff]
  %v811 = vld [vmem:[%s5 + $0x580] sm:$0xff]
  %v812 = vld [vmem:[%s5 + $0x588] sm:$0xff]
  %v813 = vld [vmem:[%s5 + $0x590] sm:$0xf]
  %v814 = vld [vmem:[%s5 + $0x594] sm:$0xff]
  %v815 = vld [vmem:[%s5 + $0x59c] sm:$0xff]
  %v816 = vld [vmem:[%s5 + $0x5a4] sm:$0xff]
  %v817 = vld [vmem:[%s5 + $0x5ac] sm:$0xf]
  %v818 = vld [vmem:[%s5 + $0x5b0] sm:$0xff]
  %v819 = vld [vmem:[%s5 + $0x5b8] sm:$0xff]
  %v820 = vld [vmem:[%s5 + $0x5c0] sm:$0xff]
  %v821 = vld [vmem:[%s5 + $0x5c8] sm:$0xf]
  %v822 = vld [vmem:[%s5 + $0x5cc] sm:$0xff]
  %v823 = vld [vmem:[%s5 + $0x5d4] sm:$0xff]
  %v824 = vld [vmem:[%s5 + $0x5dc] sm:$0xff]
  %v825 = vld [vmem:[%s5 + $0x5e4] sm:$0xf]
  %v826 = vld [vmem:[%s5 + $0x5e8] sm:$0xff]
  %v827 = vld [vmem:[%s5 + $0x5f0] sm:$0xff]
  %v828 = vld [vmem:[%s5 + $0x5f8] sm:$0xff]
  %v829 = vld [vmem:[%s5 + $0x600] sm:$0xf]
  %v830 = vld [vmem:[%s5 + $0x604] sm:$0xff]
  %v831 = vld [vmem:[%s5 + $0x60c] sm:$0xff]
  %v832 = vld [vmem:[%s5 + $0x614] sm:$0xff]
  %v833 = vld [vmem:[%s5 + $0x61c] sm:$0xf]
  %v834 = vld [vmem:[%s5 + $0x620] sm:$0xff]
  %v835 = vld [vmem:[%s5 + $0x628] sm:$0xff]
  %v836 = vld [vmem:[%s5 + $0x630] sm:$0xff]
  %v837 = vld [vmem:[%s5 + $0x638] sm:$0xf]
  %v838 = vld [vmem:[%s5 + $0x63c] sm:$0xff]
  %v839 = vld [vmem:[%s5 + $0x644] sm:$0xff]
  %v840 = vld [vmem:[%s5 + $0x64c] sm:$0xff]
  %v841 = vld [vmem:[%s5 + $0x654] sm:$0xf]
  %v842 = vld [vmem:[%s5 + $0x658] sm:$0xff]
  %v843 = vld [vmem:[%s5 + $0x660] sm:$0xff]
  %v844 = vld [vmem:[%s5 + $0x668] sm:$0xff]
  %v845 = vld [vmem:[%s5 + $0x670] sm:$0xf]
  %v846 = vld [vmem:[%s5 + $0x674] sm:$0xff]
  %v847 = vld [vmem:[%s5 + $0x67c] sm:$0xff]
  %v848 = vld [vmem:[%s5 + $0x684] sm:$0xff]
  %v849 = vld [vmem:[%s5 + $0x68c] sm:$0xf]
  %v850 = vld [vmem:[%s5 + $0x690] sm:$0xff]
  %v851 = vld [vmem:[%s5 + $0x698] sm:$0xff]
  %v852 = vld [vmem:[%s5 + $0x6a0] sm:$0xff]
  %v853 = vld [vmem:[%s5 + $0x6a8] sm:$0xf]
  %v854 = vld [vmem:[%s5 + $0x6ac] sm:$0xff]
  %v855 = vld [vmem:[%s5 + $0x6b4] sm:$0xff]
  %v856 = vld [vmem:[%s5 + $0x6bc] sm:$0xff]
  %v857 = vld [vmem:[%s5 + $0x6c4] sm:$0xf]
  %v858 = vld [vmem:[%s5 + $0x6c8] sm:$0xff]
  %v859 = vld [vmem:[%s5 + $0x6d0] sm:$0xff]
  %v860 = vld [vmem:[%s5 + $0x6d8] sm:$0xff]
  %v861 = vld [vmem:[%s5 + $0x6e0] sm:$0xf]
  %v862 = vld [vmem:[%s5 + $0x6e4] sm:$0xff]
  %v863 = vld [vmem:[%s5 + $0x6ec] sm:$0xff]
  %v864 = vld [vmem:[%s5 + $0x6f4] sm:$0xff]
  %v865 = vld [vmem:[%s5 + $0x6fc] sm:$0xf]
  %v866 = vld [vmem:[%s6] sm:$0xff]
  %v868 = vlaneseq
  %v869 = vshrl.u32 %v868, 7
  %v870 = vsub.s32 0, %v869
  %v871 = vrot.slane %v866, %v870
  %v872 = vlaneseq
  %v873 = vshrl.u32 %v872, 7
  %v874 = vsub.s32 1, %v873
  %v875 = vrot.slane %v866, %v874
  %v876 = vlaneseq
  %v877 = vshrl.u32 %v876, 7
  %v878 = vsub.s32 2, %v877
  %v879 = vrot.slane %v866, %v878
  %v880 = vlaneseq
  %v881 = vshrl.u32 %v880, 7
  %v882 = vsub.s32 3, %v881
  %v883 = vrot.slane %v866, %v882
  %v884 = vlaneseq
  %v885 = vshrl.u32 %v884, 7
  %v886 = vsub.s32 4, %v885
  %v887 = vrot.slane %v866, %v886
  %v888 = vlaneseq
  %v889 = vshrl.u32 %v888, 7
  %v890 = vsub.s32 5, %v889
  %v891 = vrot.slane %v866, %v890
  %v892 = vlaneseq
  %v893 = vshrl.u32 %v892, 7
  %v894 = vsub.s32 6, %v893
  %v895 = vrot.slane %v866, %v894
  %v1159 = vunpack.c.l.b16 %v610
  %v1160 = vunpack.c.h.b16 %v610
  %v1161 = vunpack.c.l.b16 %v611
  %v1162 = vunpack.c.h.b16 %v611
  %v1163 = vunpack.c.l.b16 %v612
  %v1164 = vunpack.c.h.b16 %v612
  %v1165 = vunpack.c.l.b16 %v613
  %v1166 = vunpack.c.l.b16 %v614
  %v1167 = vunpack.c.h.b16 %v614
  %v1168 = vunpack.c.l.b16 %v615
  %v1169 = vunpack.c.h.b16 %v615
  %v1170 = vunpack.c.l.b16 %v616
  %v1171 = vunpack.c.h.b16 %v616
  %v1172 = vunpack.c.l.b16 %v617
  %v1173 = vunpack.c.l.b16 %v618
  %v1174 = vunpack.c.h.b16 %v618
  %v1175 = vunpack.c.l.b16 %v619
  %v1176 = vunpack.c.h.b16 %v619
  %v1177 = vunpack.c.l.b16 %v620
  %v1178 = vunpack.c.h.b16 %v620
  %v1179 = vunpack.c.l.b16 %v621
  %v1180 = vunpack.c.l.b16 %v622
  %v1181 = vunpack.c.h.b16 %v622
  %v1182 = vunpack.c.l.b16 %v623
  %v1183 = vunpack.c.h.b16 %v623
  %v1184 = vunpack.c.l.b16 %v624
  %v1185 = vunpack.c.h.b16 %v624
  %v1186 = vunpack.c.l.b16 %v625
  %v1187 = vunpack.c.l.b16 %v626
  %v1188 = vunpack.c.h.b16 %v626
  %v1189 = vunpack.c.l.b16 %v627
  %v1190 = vunpack.c.h.b16 %v627
  %v1191 = vunpack.c.l.b16 %v628
  %v1192 = vunpack.c.h.b16 %v628
  %v1193 = vunpack.c.l.b16 %v629
  %v1194 = vunpack.c.l.b16 %v630
  %v1195 = vunpack.c.h.b16 %v630
  %v1196 = vunpack.c.l.b16 %v631
  %v1197 = vunpack.c.h.b16 %v631
  %v1198 = vunpack.c.l.b16 %v632
  %v1199 = vunpack.c.h.b16 %v632
  %v1200 = vunpack.c.l.b16 %v633
  %v1201 = vunpack.c.l.b16 %v634
  %v1202 = vunpack.c.h.b16 %v634
  %v1203 = vunpack.c.l.b16 %v635
  %v1204 = vunpack.c.h.b16 %v635
  %v1205 = vunpack.c.l.b16 %v636
  %v1206 = vunpack.c.h.b16 %v636
  %v1207 = vunpack.c.l.b16 %v637
  %v1208 = vunpack.c.l.b16 %v638
  %v1209 = vunpack.c.h.b16 %v638
  %v1210 = vunpack.c.l.b16 %v639
  %v1211 = vunpack.c.h.b16 %v639
  %v1212 = vunpack.c.l.b16 %v640
  %v1213 = vunpack.c.h.b16 %v640
  %v1214 = vunpack.c.l.b16 %v641
  %v1215 = vunpack.c.l.b16 %v642
  %v1216 = vunpack.c.h.b16 %v642
  %v1217 = vunpack.c.l.b16 %v643
  %v1218 = vunpack.c.h.b16 %v643
  %v1219 = vunpack.c.l.b16 %v644
  %v1220 = vunpack.c.h.b16 %v644
  %v1221 = vunpack.c.l.b16 %v645
  %v1222 = vunpack.c.l.b16 %v646
  %v1223 = vunpack.c.h.b16 %v646
  %v1224 = vunpack.c.l.b16 %v647
  %v1225 = vunpack.c.h.b16 %v647
  %v1226 = vunpack.c.l.b16 %v648
  %v1227 = vunpack.c.h.b16 %v648
  %v1228 = vunpack.c.l.b16 %v649
  %v1229 = vunpack.c.l.b16 %v650
  %v1230 = vunpack.c.h.b16 %v650
  %v1231 = vunpack.c.l.b16 %v651
  %v1232 = vunpack.c.h.b16 %v651
  %v1233 = vunpack.c.l.b16 %v652
  %v1234 = vunpack.c.h.b16 %v652
  %v1235 = vunpack.c.l.b16 %v653
  %v1236 = vunpack.c.l.b16 %v654
  %v1237 = vunpack.c.h.b16 %v654
  %v1238 = vunpack.c.l.b16 %v655
  %v1239 = vunpack.c.h.b16 %v655
  %v1240 = vunpack.c.l.b16 %v656
  %v1241 = vunpack.c.h.b16 %v656
  %v1242 = vunpack.c.l.b16 %v657
  %v1243 = vunpack.c.l.b16 %v658
  %v1244 = vunpack.c.h.b16 %v658
  %v1245 = vunpack.c.l.b16 %v659
  %v1246 = vunpack.c.h.b16 %v659
  %v1247 = vunpack.c.l.b16 %v660
  %v1248 = vunpack.c.h.b16 %v660
  %v1249 = vunpack.c.l.b16 %v661
  %v1250 = vunpack.c.l.b16 %v662
  %v1251 = vunpack.c.h.b16 %v662
  %v1252 = vunpack.c.l.b16 %v663
  %v1253 = vunpack.c.h.b16 %v663
  %v1254 = vunpack.c.l.b16 %v664
  %v1255 = vunpack.c.h.b16 %v664
  %v1256 = vunpack.c.l.b16 %v665
  %v1257 = vunpack.c.l.b16 %v666
  %v1258 = vunpack.c.h.b16 %v666
  %v1259 = vunpack.c.l.b16 %v667
  %v1260 = vunpack.c.h.b16 %v667
  %v1261 = vunpack.c.l.b16 %v668
  %v1262 = vunpack.c.h.b16 %v668
  %v1263 = vunpack.c.l.b16 %v669
  %v1264 = vunpack.c.l.b16 %v670
  %v1265 = vunpack.c.h.b16 %v670
  %v1266 = vunpack.c.l.b16 %v671
  %v1267 = vunpack.c.h.b16 %v671
  %v1268 = vunpack.c.l.b16 %v672
  %v1269 = vunpack.c.h.b16 %v672
  %v1270 = vunpack.c.l.b16 %v673
  %v1271 = vunpack.c.l.b16 %v674
  %v1272 = vunpack.c.h.b16 %v674
  %v1273 = vunpack.c.l.b16 %v675
  %v1274 = vunpack.c.h.b16 %v675
  %v1275 = vunpack.c.l.b16 %v676
  %v1276 = vunpack.c.h.b16 %v676
  %v1277 = vunpack.c.l.b16 %v677
  %v1278 = vunpack.c.l.b16 %v678
  %v1279 = vunpack.c.h.b16 %v678
  %v1280 = vunpack.c.l.b16 %v679
  %v1281 = vunpack.c.h.b16 %v679
  %v1282 = vunpack.c.l.b16 %v680
  %v1283 = vunpack.c.h.b16 %v680
  %v1284 = vunpack.c.l.b16 %v681
  %v1285 = vunpack.c.l.b16 %v682
  %v1286 = vunpack.c.h.b16 %v682
  %v1287 = vunpack.c.l.b16 %v683
  %v1288 = vunpack.c.h.b16 %v683
  %v1289 = vunpack.c.l.b16 %v684
  %v1290 = vunpack.c.h.b16 %v684
  %v1291 = vunpack.c.l.b16 %v685
  %v1292 = vunpack.c.l.b16 %v686
  %v1293 = vunpack.c.h.b16 %v686
  %v1294 = vunpack.c.l.b16 %v687
  %v1295 = vunpack.c.h.b16 %v687
  %v1296 = vunpack.c.l.b16 %v688
  %v1297 = vunpack.c.h.b16 %v688
  %v1298 = vunpack.c.l.b16 %v689
  %v1299 = vunpack.c.l.b16 %v690
  %v1300 = vunpack.c.h.b16 %v690
  %v1301 = vunpack.c.l.b16 %v691
  %v1302 = vunpack.c.h.b16 %v691
  %v1303 = vunpack.c.l.b16 %v692
  %v1304 = vunpack.c.h.b16 %v692
  %v1305 = vunpack.c.l.b16 %v693
  %v1306 = vunpack.c.l.b16 %v694
  %v1307 = vunpack.c.h.b16 %v694
  %v1308 = vunpack.c.l.b16 %v695
  %v1309 = vunpack.c.h.b16 %v695
  %v1310 = vunpack.c.l.b16 %v696
  %v1311 = vunpack.c.h.b16 %v696
  %v1312 = vunpack.c.l.b16 %v697
  %v1313 = vunpack.c.l.b16 %v698
  %v1314 = vunpack.c.h.b16 %v698
  %v1315 = vunpack.c.l.b16 %v699
  %v1316 = vunpack.c.h.b16 %v699
  %v1317 = vunpack.c.l.b16 %v700
  %v1318 = vunpack.c.h.b16 %v700
  %v1319 = vunpack.c.l.b16 %v701
  %v1320 = vunpack.c.l.b16 %v702
  %v1321 = vunpack.c.h.b16 %v702
  %v1322 = vunpack.c.l.b16 %v703
  %v1323 = vunpack.c.h.b16 %v703
  %v1324 = vunpack.c.l.b16 %v704
  %v1325 = vunpack.c.h.b16 %v704
  %v1326 = vunpack.c.l.b16 %v705
  %v1327 = vunpack.c.l.b16 %v706
  %v1328 = vunpack.c.h.b16 %v706
  %v1329 = vunpack.c.l.b16 %v707
  %v1330 = vunpack.c.h.b16 %v707
  %v1331 = vunpack.c.l.b16 %v708
  %v1332 = vunpack.c.h.b16 %v708
  %v1333 = vunpack.c.l.b16 %v709
  %v1334 = vunpack.c.l.b16 %v710
  %v1335 = vunpack.c.h.b16 %v710
  %v1336 = vunpack.c.l.b16 %v711
  %v1337 = vunpack.c.h.b16 %v711
  %v1338 = vunpack.c.l.b16 %v712
  %v1339 = vunpack.c.h.b16 %v712
  %v1340 = vunpack.c.l.b16 %v713
  %v1341 = vunpack.c.l.b16 %v714
  %v1342 = vunpack.c.h.b16 %v714
  %v1343 = vunpack.c.l.b16 %v715
  %v1344 = vunpack.c.h.b16 %v715
  %v1345 = vunpack.c.l.b16 %v716
  %v1346 = vunpack.c.h.b16 %v716
  %v1347 = vunpack.c.l.b16 %v717
  %v1348 = vunpack.c.l.b16 %v718
  %v1349 = vunpack.c.h.b16 %v718
  %v1350 = vunpack.c.l.b16 %v719
  %v1351 = vunpack.c.h.b16 %v719
  %v1352 = vunpack.c.l.b16 %v720
  %v1353 = vunpack.c.h.b16 %v720
  %v1354 = vunpack.c.l.b16 %v721
  %v1355 = vunpack.c.l.b16 %v722
  %v1356 = vunpack.c.h.b16 %v722
  %v1357 = vunpack.c.l.b16 %v723
  %v1358 = vunpack.c.h.b16 %v723
  %v1359 = vunpack.c.l.b16 %v724
  %v1360 = vunpack.c.h.b16 %v724
  %v1361 = vunpack.c.l.b16 %v725
  %v1362 = vunpack.c.l.b16 %v726
  %v1363 = vunpack.c.h.b16 %v726
  %v1364 = vunpack.c.l.b16 %v727
  %v1365 = vunpack.c.h.b16 %v727
  %v1366 = vunpack.c.l.b16 %v728
  %v1367 = vunpack.c.h.b16 %v728
  %v1368 = vunpack.c.l.b16 %v729
  %v1369 = vunpack.c.l.b16 %v730
  %v1370 = vunpack.c.h.b16 %v730
  %v1371 = vunpack.c.l.b16 %v731
  %v1372 = vunpack.c.h.b16 %v731
  %v1373 = vunpack.c.l.b16 %v732
  %v1374 = vunpack.c.h.b16 %v732
  %v1375 = vunpack.c.l.b16 %v733
  %v1376 = vunpack.c.l.b16 %v734
  %v1377 = vunpack.c.h.b16 %v734
  %v1378 = vunpack.c.l.b16 %v735
  %v1379 = vunpack.c.h.b16 %v735
  %v1380 = vunpack.c.l.b16 %v736
  %v1381 = vunpack.c.h.b16 %v736
  %v1382 = vunpack.c.l.b16 %v737
  %v1383 = vunpack.c.l.b16 %v738
  %v1384 = vunpack.c.h.b16 %v738
  %v1385 = vunpack.c.l.b16 %v739
  %v1386 = vunpack.c.h.b16 %v739
  %v1387 = vunpack.c.l.b16 %v740
  %v1388 = vunpack.c.h.b16 %v740
  %v1389 = vunpack.c.l.b16 %v741
  %v1390 = vunpack.c.l.b16 %v742
  %v1391 = vunpack.c.h.b16 %v742
  %v1392 = vunpack.c.l.b16 %v743
  %v1393 = vunpack.c.h.b16 %v743
  %v1394 = vunpack.c.l.b16 %v744
  %v1395 = vunpack.c.h.b16 %v744
  %v1396 = vunpack.c.l.b16 %v745
  %v1397 = vunpack.c.l.b16 %v746
  %v1398 = vunpack.c.h.b16 %v746
  %v1399 = vunpack.c.l.b16 %v747
  %v1400 = vunpack.c.h.b16 %v747
  %v1401 = vunpack.c.l.b16 %v748
  %v1402 = vunpack.c.h.b16 %v748
  %v1403 = vunpack.c.l.b16 %v749
  %v1404 = vunpack.c.l.b16 %v750
  %v1405 = vunpack.c.h.b16 %v750
  %v1406 = vunpack.c.l.b16 %v751
  %v1407 = vunpack.c.h.b16 %v751
  %v1408 = vunpack.c.l.b16 %v752
  %v1409 = vunpack.c.h.b16 %v752
  %v1410 = vunpack.c.l.b16 %v753
  %v1411 = vunpack.c.l.b16 %v754
  %v1412 = vunpack.c.h.b16 %v754
  %v1413 = vunpack.c.l.b16 %v755
  %v1414 = vunpack.c.h.b16 %v755
  %v1415 = vunpack.c.l.b16 %v756
  %v1416 = vunpack.c.h.b16 %v756
  %v1417 = vunpack.c.l.b16 %v757
  %v1418 = vunpack.c.l.b16 %v758
  %v1419 = vunpack.c.h.b16 %v758
  %v1420 = vunpack.c.l.b16 %v759
  %v1421 = vunpack.c.h.b16 %v759
  %v1422 = vunpack.c.l.b16 %v760
  %v1423 = vunpack.c.h.b16 %v760
  %v1424 = vunpack.c.l.b16 %v761
  %v1425 = vunpack.c.l.b16 %v762
  %v1426 = vunpack.c.h.b16 %v762
  %v1427 = vunpack.c.l.b16 %v763
  %v1428 = vunpack.c.h.b16 %v763
  %v1429 = vunpack.c.l.b16 %v764
  %v1430 = vunpack.c.h.b16 %v764
  %v1431 = vunpack.c.l.b16 %v765
  %v1432 = vunpack.c.l.b16 %v766
  %v1433 = vunpack.c.h.b16 %v766
  %v1434 = vunpack.c.l.b16 %v767
  %v1435 = vunpack.c.h.b16 %v767
  %v1436 = vunpack.c.l.b16 %v768
  %v1437 = vunpack.c.h.b16 %v768
  %v1438 = vunpack.c.l.b16 %v769
  %v1439 = vunpack.c.l.b16 %v770
  %v1440 = vunpack.c.h.b16 %v770
  %v1441 = vunpack.c.l.b16 %v771
  %v1442 = vunpack.c.h.b16 %v771
  %v1443 = vunpack.c.l.b16 %v772
  %v1444 = vunpack.c.h.b16 %v772
  %v1445 = vunpack.c.l.b16 %v773
  %v1446 = vunpack.c.l.b16 %v774
  %v1447 = vunpack.c.h.b16 %v774
  %v1448 = vunpack.c.l.b16 %v775
  %v1449 = vunpack.c.h.b16 %v775
  %v1450 = vunpack.c.l.b16 %v776
  %v1451 = vunpack.c.h.b16 %v776
  %v1452 = vunpack.c.l.b16 %v777
  %v1453 = vunpack.c.l.b16 %v778
  %v1454 = vunpack.c.h.b16 %v778
  %v1455 = vunpack.c.l.b16 %v779
  %v1456 = vunpack.c.h.b16 %v779
  %v1457 = vunpack.c.l.b16 %v780
  %v1458 = vunpack.c.h.b16 %v780
  %v1459 = vunpack.c.l.b16 %v781
  %v1460 = vunpack.c.l.b16 %v782
  %v1461 = vunpack.c.h.b16 %v782
  %v1462 = vunpack.c.l.b16 %v783
  %v1463 = vunpack.c.h.b16 %v783
  %v1464 = vunpack.c.l.b16 %v784
  %v1465 = vunpack.c.h.b16 %v784
  %v1466 = vunpack.c.l.b16 %v785
  %v1467 = vunpack.c.l.b16 %v786
  %v1468 = vunpack.c.h.b16 %v786
  %v1469 = vunpack.c.l.b16 %v787
  %v1470 = vunpack.c.h.b16 %v787
  %v1471 = vunpack.c.l.b16 %v788
  %v1472 = vunpack.c.h.b16 %v788
  %v1473 = vunpack.c.l.b16 %v789
  %v1474 = vunpack.c.l.b16 %v790
  %v1475 = vunpack.c.h.b16 %v790
  %v1476 = vunpack.c.l.b16 %v791
  %v1477 = vunpack.c.h.b16 %v791
  %v1478 = vunpack.c.l.b16 %v792
  %v1479 = vunpack.c.h.b16 %v792
  %v1480 = vunpack.c.l.b16 %v793
  %v1481 = vunpack.c.l.b16 %v794
  %v1482 = vunpack.c.h.b16 %v794
  %v1483 = vunpack.c.l.b16 %v795
  %v1484 = vunpack.c.h.b16 %v795
  %v1485 = vunpack.c.l.b16 %v796
  %v1486 = vunpack.c.h.b16 %v796
  %v1487 = vunpack.c.l.b16 %v797
  %v1488 = vunpack.c.l.b16 %v798
  %v1489 = vunpack.c.h.b16 %v798
  %v1490 = vunpack.c.l.b16 %v799
  %v1491 = vunpack.c.h.b16 %v799
  %v1492 = vunpack.c.l.b16 %v800
  %v1493 = vunpack.c.h.b16 %v800
  %v1494 = vunpack.c.l.b16 %v801
  %v1495 = vunpack.c.l.b16 %v802
  %v1496 = vunpack.c.h.b16 %v802
  %v1497 = vunpack.c.l.b16 %v803
  %v1498 = vunpack.c.h.b16 %v803
  %v1499 = vunpack.c.l.b16 %v804
  %v1500 = vunpack.c.h.b16 %v804
  %v1501 = vunpack.c.l.b16 %v805
  %v1502 = vunpack.c.l.b16 %v806
  %v1503 = vunpack.c.h.b16 %v806
  %v1504 = vunpack.c.l.b16 %v807
  %v1505 = vunpack.c.h.b16 %v807
  %v1506 = vunpack.c.l.b16 %v808
  %v1507 = vunpack.c.h.b16 %v808
  %v1508 = vunpack.c.l.b16 %v809
  %v1509 = vunpack.c.l.b16 %v810
  %v1510 = vunpack.c.h.b16 %v810
  %v1511 = vunpack.c.l.b16 %v811
  %v1512 = vunpack.c.h.b16 %v811
  %v1513 = vunpack.c.l.b16 %v812
  %v1514 = vunpack.c.h.b16 %v812
  %v1515 = vunpack.c.l.b16 %v813
  %v1516 = vunpack.c.l.b16 %v814
  %v1517 = vunpack.c.h.b16 %v814
  %v1518 = vunpack.c.l.b16 %v815
  %v1519 = vunpack.c.h.b16 %v815
  %v1520 = vunpack.c.l.b16 %v816
  %v1521 = vunpack.c.h.b16 %v816
  %v1522 = vunpack.c.l.b16 %v817
  %v1523 = vunpack.c.l.b16 %v818
  %v1524 = vunpack.c.h.b16 %v818
  %v1525 = vunpack.c.l.b16 %v819
  %v1526 = vunpack.c.h.b16 %v819
  %v1527 = vunpack.c.l.b16 %v820
  %v1528 = vunpack.c.h.b16 %v820
  %v1529 = vunpack.c.l.b16 %v821
  %v1530 = vunpack.c.l.b16 %v822
  %v1531 = vunpack.c.h.b16 %v822
  %v1532 = vunpack.c.l.b16 %v823
  %v1533 = vunpack.c.h.b16 %v823
  %v1534 = vunpack.c.l.b16 %v824
  %v1535 = vunpack.c.h.b16 %v824
  %v1536 = vunpack.c.l.b16 %v825
  %v1537 = vunpack.c.l.b16 %v826
  %v1538 = vunpack.c.h.b16 %v826
  %v1539 = vunpack.c.l.b16 %v827
  %v1540 = vunpack.c.h.b16 %v827
  %v1541 = vunpack.c.l.b16 %v828
  %v1542 = vunpack.c.h.b16 %v828
  %v1543 = vunpack.c.l.b16 %v829
  %v1544 = vunpack.c.l.b16 %v830
  %v1545 = vunpack.c.h.b16 %v830
  %v1546 = vunpack.c.l.b16 %v831
  %v1547 = vunpack.c.h.b16 %v831
  %v1548 = vunpack.c.l.b16 %v832
  %v1549 = vunpack.c.h.b16 %v832
  %v1550 = vunpack.c.l.b16 %v833
  %v1551 = vunpack.c.l.b16 %v834
  %v1552 = vunpack.c.h.b16 %v834
  %v1553 = vunpack.c.l.b16 %v835
  %v1554 = vunpack.c.h.b16 %v835
  %v1555 = vunpack.c.l.b16 %v836
  %v1556 = vunpack.c.h.b16 %v836
  %v1557 = vunpack.c.l.b16 %v837
  %v1558 = vunpack.c.l.b16 %v838
  %v1559 = vunpack.c.h.b16 %v838
  %v1560 = vunpack.c.l.b16 %v839
  %v1561 = vunpack.c.h.b16 %v839
  %v1562 = vunpack.c.l.b16 %v840
  %v1563 = vunpack.c.h.b16 %v840
  %v1564 = vunpack.c.l.b16 %v841
  %v1565 = vunpack.c.l.b16 %v842
  %v1566 = vunpack.c.h.b16 %v842
  %v1567 = vunpack.c.l.b16 %v843
  %v1568 = vunpack.c.h.b16 %v843
  %v1569 = vunpack.c.l.b16 %v844
  %v1570 = vunpack.c.h.b16 %v844
  %v1571 = vunpack.c.l.b16 %v845
  %v1572 = vunpack.c.l.b16 %v846
  %v1573 = vunpack.c.h.b16 %v846
  %v1574 = vunpack.c.l.b16 %v847
  %v1575 = vunpack.c.h.b16 %v847
  %v1576 = vunpack.c.l.b16 %v848
  %v1577 = vunpack.c.h.b16 %v848
  %v1578 = vunpack.c.l.b16 %v849
  %v1579 = vunpack.c.l.b16 %v850
  %v1580 = vunpack.c.h.b16 %v850
  %v1581 = vunpack.c.l.b16 %v851
  %v1582 = vunpack.c.h.b16 %v851
  %v1583 = vunpack.c.l.b16 %v852
  %v1584 = vunpack.c.h.b16 %v852
  %v1585 = vunpack.c.l.b16 %v853
  %v1586 = vunpack.c.l.b16 %v854
  %v1587 = vunpack.c.h.b16 %v854
  %v1588 = vunpack.c.l.b16 %v855
  %v1589 = vunpack.c.h.b16 %v855
  %v1590 = vunpack.c.l.b16 %v856
  %v1591 = vunpack.c.h.b16 %v856
  %v1592 = vunpack.c.l.b16 %v857
  %v1593 = vunpack.c.l.b16 %v858
  %v1594 = vunpack.c.h.b16 %v858
  %v1595 = vunpack.c.l.b16 %v859
  %v1596 = vunpack.c.h.b16 %v859
  %v1597 = vunpack.c.l.b16 %v860
  %v1598 = vunpack.c.h.b16 %v860
  %v1599 = vunpack.c.l.b16 %v861
  %v1600 = vunpack.c.l.b16 %v862
  %v1601 = vunpack.c.h.b16 %v862
  %v1602 = vunpack.c.l.b16 %v863
  %v1603 = vunpack.c.h.b16 %v863
  %v1604 = vunpack.c.l.b16 %v864
  %v1605 = vunpack.c.h.b16 %v864
  %v1606 = vunpack.c.l.b16 %v865
  %v1607 = vpack.c.b16 %v1166, %v1159
  %v1608 = vpack.c.b16 %v1167, %v1160
  %v1609 = vpack.c.b16 %v1168, %v1161
  %v1610 = vpack.c.b16 %v1169, %v1162
  %v1611 = vpack.c.b16 %v1170, %v1163
  %v1612 = vpack.c.b16 %v1171, %v1164
  %v1613 = vpack.c.b16 %v1172, %v1165
  %v1614 = vpack.c.b16 %v1180, %v1173
  %v1615 = vpack.c.b16 %v1181, %v1174
  %v1616 = vpack.c.b16 %v1182, %v1175
  %v1617 = vpack.c.b16 %v1183, %v1176
  %v1618 = vpack.c.b16 %v1184, %v1177
  %v1619 = vpack.c.b16 %v1185, %v1178
  %v1620 = vpack.c.b16 %v1186, %v1179
  %v1621 = vpack.c.b16 %v1194, %v1187
  %v1622 = vpack.c.b16 %v1195, %v1188
  %v1623 = vpack.c.b16 %v1196, %v1189
  %v1624 = vpack.c.b16 %v1197, %v1190
  %v1625 = vpack.c.b16 %v1198, %v1191
  %v1626 = vpack.c.b16 %v1199, %v1192
  %v1627 = vpack.c.b16 %v1200, %v1193
  %v1628 = vpack.c.b16 %v1208, %v1201
  %v1629 = vpack.c.b16 %v1209, %v1202
  %v1630 = vpack.c.b16 %v1210, %v1203
  %v1631 = vpack.c.b16 %v1211, %v1204
  %v1632 = vpack.c.b16 %v1212, %v1205
  %v1633 = vpack.c.b16 %v1213, %v1206
  %v1634 = vpack.c.b16 %v1214, %v1207
  %v1635 = vpack.c.b16 %v1222, %v1215
  %v1636 = vpack.c.b16 %v1223, %v1216
  %v1637 = vpack.c.b16 %v1224, %v1217
  %v1638 = vpack.c.b16 %v1225, %v1218
  %v1639 = vpack.c.b16 %v1226, %v1219
  %v1640 = vpack.c.b16 %v1227, %v1220
  %v1641 = vpack.c.b16 %v1228, %v1221
  %v1642 = vpack.c.b16 %v1236, %v1229
  %v1643 = vpack.c.b16 %v1237, %v1230
  %v1644 = vpack.c.b16 %v1238, %v1231
  %v1645 = vpack.c.b16 %v1239, %v1232
  %v1646 = vpack.c.b16 %v1240, %v1233
  %v1647 = vpack.c.b16 %v1241, %v1234
  %v1648 = vpack.c.b16 %v1242, %v1235
  %v1649 = vpack.c.b16 %v1250, %v1243
  %v1650 = vpack.c.b16 %v1251, %v1244
  %v1651 = vpack.c.b16 %v1252, %v1245
  %v1652 = vpack.c.b16 %v1253, %v1246
  %v1653 = vpack.c.b16 %v1254, %v1247
  %v1654 = vpack.c.b16 %v1255, %v1248
  %v1655 = vpack.c.b16 %v1256, %v1249
  %v1656 = vpack.c.b16 %v1264, %v1257
  %v1657 = vpack.c.b16 %v1265, %v1258
  %v1658 = vpack.c.b16 %v1266, %v1259
  %v1659 = vpack.c.b16 %v1267, %v1260
  %v1660 = vpack.c.b16 %v1268, %v1261
  %v1661 = vpack.c.b16 %v1269, %v1262
  %v1662 = vpack.c.b16 %v1270, %v1263
  %v1663 = vpack.c.b16 %v1278, %v1271
  %v1664 = vpack.c.b16 %v1279, %v1272
  %v1665 = vpack.c.b16 %v1280, %v1273
  %v1666 = vpack.c.b16 %v1281, %v1274
  %v1667 = vpack.c.b16 %v1282, %v1275
  %v1668 = vpack.c.b16 %v1283, %v1276
  %v1669 = vpack.c.b16 %v1284, %v1277
  %v1670 = vpack.c.b16 %v1292, %v1285
  %v1671 = vpack.c.b16 %v1293, %v1286
  %v1672 = vpack.c.b16 %v1294, %v1287
  %v1673 = vpack.c.b16 %v1295, %v1288
  %v1674 = vpack.c.b16 %v1296, %v1289
  %v1675 = vpack.c.b16 %v1297, %v1290
  %v1676 = vpack.c.b16 %v1298, %v1291
  %v1677 = vpack.c.b16 %v1306, %v1299
  %v1678 = vpack.c.b16 %v1307, %v1300
  %v1679 = vpack.c.b16 %v1308, %v1301
  %v1680 = vpack.c.b16 %v1309, %v1302
  %v1681 = vpack.c.b16 %v1310, %v1303
  %v1682 = vpack.c.b16 %v1311, %v1304
  %v1683 = vpack.c.b16 %v1312, %v1305
  %v1684 = vpack.c.b16 %v1320, %v1313
  %v1685 = vpack.c.b16 %v1321, %v1314
  %v1686 = vpack.c.b16 %v1322, %v1315
  %v1687 = vpack.c.b16 %v1323, %v1316
  %v1688 = vpack.c.b16 %v1324, %v1317
  %v1689 = vpack.c.b16 %v1325, %v1318
  %v1690 = vpack.c.b16 %v1326, %v1319
  %v1691 = vpack.c.b16 %v1334, %v1327
  %v1692 = vpack.c.b16 %v1335, %v1328
  %v1693 = vpack.c.b16 %v1336, %v1329
  %v1694 = vpack.c.b16 %v1337, %v1330
  %v1695 = vpack.c.b16 %v1338, %v1331
  %v1696 = vpack.c.b16 %v1339, %v1332
  %v1697 = vpack.c.b16 %v1340, %v1333
  %v1698 = vpack.c.b16 %v1348, %v1341
  %v1699 = vpack.c.b16 %v1349, %v1342
  %v1700 = vpack.c.b16 %v1350, %v1343
  %v1701 = vpack.c.b16 %v1351, %v1344
  %v1702 = vpack.c.b16 %v1352, %v1345
  %v1703 = vpack.c.b16 %v1353, %v1346
  %v1704 = vpack.c.b16 %v1354, %v1347
  %v1705 = vpack.c.b16 %v1362, %v1355
  %v1706 = vpack.c.b16 %v1363, %v1356
  %v1707 = vpack.c.b16 %v1364, %v1357
  %v1708 = vpack.c.b16 %v1365, %v1358
  %v1709 = vpack.c.b16 %v1366, %v1359
  %v1710 = vpack.c.b16 %v1367, %v1360
  %v1711 = vpack.c.b16 %v1368, %v1361
  %v1712 = vpack.c.b16 %v1376, %v1369
  %v1713 = vpack.c.b16 %v1377, %v1370
  %v1714 = vpack.c.b16 %v1378, %v1371
  %v1715 = vpack.c.b16 %v1379, %v1372
  %v1716 = vpack.c.b16 %v1380, %v1373
  %v1717 = vpack.c.b16 %v1381, %v1374
  %v1718 = vpack.c.b16 %v1382, %v1375
  %v1719 = vpack.c.b16 %v1390, %v1383
  %v1720 = vpack.c.b16 %v1391, %v1384
  %v1721 = vpack.c.b16 %v1392, %v1385
  %v1722 = vpack.c.b16 %v1393, %v1386
  %v1723 = vpack.c.b16 %v1394, %v1387
  %v1724 = vpack.c.b16 %v1395, %v1388
  %v1725 = vpack.c.b16 %v1396, %v1389
  %v1726 = vpack.c.b16 %v1404, %v1397
  %v1727 = vpack.c.b16 %v1405, %v1398
  %v1728 = vpack.c.b16 %v1406, %v1399
  %v1729 = vpack.c.b16 %v1407, %v1400
  %v1730 = vpack.c.b16 %v1408, %v1401
  %v1731 = vpack.c.b16 %v1409, %v1402
  %v1732 = vpack.c.b16 %v1410, %v1403
  %v1733 = vpack.c.b16 %v1418, %v1411
  %v1734 = vpack.c.b16 %v1419, %v1412
  %v1735 = vpack.c.b16 %v1420, %v1413
  %v1736 = vpack.c.b16 %v1421, %v1414
  %v1737 = vpack.c.b16 %v1422, %v1415
  %v1738 = vpack.c.b16 %v1423, %v1416
  %v1739 = vpack.c.b16 %v1424, %v1417
  %v1740 = vpack.c.b16 %v1432, %v1425
  %v1741 = vpack.c.b16 %v1433, %v1426
  %v1742 = vpack.c.b16 %v1434, %v1427
  %v1743 = vpack.c.b16 %v1435, %v1428
  %v1744 = vpack.c.b16 %v1436, %v1429
  %v1745 = vpack.c.b16 %v1437, %v1430
  %v1746 = vpack.c.b16 %v1438, %v1431
  %v1747 = vpack.c.b16 %v1446, %v1439
  %v1748 = vpack.c.b16 %v1447, %v1440
  %v1749 = vpack.c.b16 %v1448, %v1441
  %v1750 = vpack.c.b16 %v1449, %v1442
  %v1751 = vpack.c.b16 %v1450, %v1443
  %v1752 = vpack.c.b16 %v1451, %v1444
  %v1753 = vpack.c.b16 %v1452, %v1445
  %v1754 = vpack.c.b16 %v1460, %v1453
  %v1755 = vpack.c.b16 %v1461, %v1454
  %v1756 = vpack.c.b16 %v1462, %v1455
  %v1757 = vpack.c.b16 %v1463, %v1456
  %v1758 = vpack.c.b16 %v1464, %v1457
  %v1759 = vpack.c.b16 %v1465, %v1458
  %v1760 = vpack.c.b16 %v1466, %v1459
  %v1761 = vpack.c.b16 %v1474, %v1467
  %v1762 = vpack.c.b16 %v1475, %v1468
  %v1763 = vpack.c.b16 %v1476, %v1469
  %v1764 = vpack.c.b16 %v1477, %v1470
  %v1765 = vpack.c.b16 %v1478, %v1471
  %v1766 = vpack.c.b16 %v1479, %v1472
  %v1767 = vpack.c.b16 %v1480, %v1473
  %v1768 = vpack.c.b16 %v1488, %v1481
  %v1769 = vpack.c.b16 %v1489, %v1482
  %v1770 = vpack.c.b16 %v1490, %v1483
  %v1771 = vpack.c.b16 %v1491, %v1484
  %v1772 = vpack.c.b16 %v1492, %v1485
  %v1773 = vpack.c.b16 %v1493, %v1486
  %v1774 = vpack.c.b16 %v1494, %v1487
  %v1775 = vpack.c.b16 %v1502, %v1495
  %v1776 = vpack.c.b16 %v1503, %v1496
  %v1777 = vpack.c.b16 %v1504, %v1497
  %v1778 = vpack.c.b16 %v1505, %v1498
  %v1779 = vpack.c.b16 %v1506, %v1499
  %v1780 = vpack.c.b16 %v1507, %v1500
  %v1781 = vpack.c.b16 %v1508, %v1501
  %v1782 = vpack.c.b16 %v1516, %v1509
  %v1783 = vpack.c.b16 %v1517, %v1510
  %v1784 = vpack.c.b16 %v1518, %v1511
  %v1785 = vpack.c.b16 %v1519, %v1512
  %v1786 = vpack.c.b16 %v1520, %v1513
  %v1787 = vpack.c.b16 %v1521, %v1514
  %v1788 = vpack.c.b16 %v1522, %v1515
  %v1789 = vpack.c.b16 %v1530, %v1523
  %v1790 = vpack.c.b16 %v1531, %v1524
  %v1791 = vpack.c.b16 %v1532, %v1525
  %v1792 = vpack.c.b16 %v1533, %v1526
  %v1793 = vpack.c.b16 %v1534, %v1527
  %v1794 = vpack.c.b16 %v1535, %v1528
  %v1795 = vpack.c.b16 %v1536, %v1529
  %v1796 = vpack.c.b16 %v1544, %v1537
  %v1797 = vpack.c.b16 %v1545, %v1538
  %v1798 = vpack.c.b16 %v1546, %v1539
  %v1799 = vpack.c.b16 %v1547, %v1540
  %v1800 = vpack.c.b16 %v1548, %v1541
  %v1801 = vpack.c.b16 %v1549, %v1542
  %v1802 = vpack.c.b16 %v1550, %v1543
  %v1803 = vpack.c.b16 %v1558, %v1551
  %v1804 = vpack.c.b16 %v1559, %v1552
  %v1805 = vpack.c.b16 %v1560, %v1553
  %v1806 = vpack.c.b16 %v1561, %v1554
  %v1807 = vpack.c.b16 %v1562, %v1555
  %v1808 = vpack.c.b16 %v1563, %v1556
  %v1809 = vpack.c.b16 %v1564, %v1557
  %v1810 = vpack.c.b16 %v1572, %v1565
  %v1811 = vpack.c.b16 %v1573, %v1566
  %v1812 = vpack.c.b16 %v1574, %v1567
  %v1813 = vpack.c.b16 %v1575, %v1568
  %v1814 = vpack.c.b16 %v1576, %v1569
  %v1815 = vpack.c.b16 %v1577, %v1570
  %v1816 = vpack.c.b16 %v1578, %v1571
  %v1817 = vpack.c.b16 %v1586, %v1579
  %v1818 = vpack.c.b16 %v1587, %v1580
  %v1819 = vpack.c.b16 %v1588, %v1581
  %v1820 = vpack.c.b16 %v1589, %v1582
  %v1821 = vpack.c.b16 %v1590, %v1583
  %v1822 = vpack.c.b16 %v1591, %v1584
  %v1823 = vpack.c.b16 %v1592, %v1585
  %v1824 = vpack.c.b16 %v1600, %v1593
  %v1825 = vpack.c.b16 %v1601, %v1594
  %v1826 = vpack.c.b16 %v1602, %v1595
  %v1827 = vpack.c.b16 %v1603, %v1596
  %v1828 = vpack.c.b16 %v1604, %v1597
  %v1829 = vpack.c.b16 %v1605, %v1598
  %v1830 = vpack.c.b16 %v1606, %v1599
  %2055 = vmatprep.subr.bf16.mxu0 %v1608
  %2056 = vmatpush1.bf16.msra.mxu0 %v1607
  %2057 = vmatprep.subr.bf16.mxu0 %v1615
  %2058 = vmatpush1.bf16.msra.mxu0 %v1614
  %2059 = vmatprep.subr.bf16.mxu0 %v1622
  %2060 = vmatpush1.bf16.msra.mxu0 %v1621
  %2061 = vmatprep.subr.bf16.mxu0 %v1629
  %2062 = vmatpush1.bf16.msra.mxu0 %v1628
  %2063 = vmatprep.subr.bf16.mxu0 %v1636
  %2064 = vmatpush1.bf16.msra.mxu0 %v1635
  %2065 = vmatprep.subr.bf16.mxu0 %v1643
  %2066 = vmatpush1.bf16.msra.mxu0 %v1642
  %2067 = vmatprep.subr.bf16.mxu0 %v1650
  %2068 = vmatpush1.bf16.msra.mxu0 %v1649
  %2069 = vmatprep.subr.bf16.mxu0 %v1657
  %2070 = vmatpush1.bf16.msra.mxu0 %v1656
  %2071 = vmatprep.subr.bf16.mxu0 %v1664
  %2072 = vmatpush1.bf16.msra.mxu0 %v1663
  %2073 = vmatprep.subr.bf16.mxu0 %v1671
  %2074 = vmatpush1.bf16.msra.mxu0 %v1670
  %2075 = vmatprep.subr.bf16.mxu0 %v1678
  %2076 = vmatpush1.bf16.msra.mxu0 %v1677
  %2077 = vmatprep.subr.bf16.mxu0 %v1685
  %2078 = vmatpush1.bf16.msra.mxu0 %v1684
  %2079 = vmatprep.subr.bf16.mxu0 %v1692
  %2080 = vmatpush1.bf16.msra.mxu0 %v1691
  %2081 = vmatprep.subr.bf16.mxu0 %v1699
  %2082 = vmatpush1.bf16.msra.mxu0 %v1698
  %2083 = vmatprep.subr.bf16.mxu0 %v1706
  %2084 = vmatpush1.bf16.msra.mxu0 %v1705
  %2085 = vmatprep.subr.bf16.mxu0 %v1713
  %2086 = vmatpush1.bf16.msra.mxu0 %v1712
  %2087 = vmatprep.mubr.bf16.mxu0 %v607
  %2088 = vmatmul.mubr.bf16.gmra.mrb[0].mxu0 %v606
  %v2089 = vpop.f32.mrb[0].mxu0
  %v2090 = vadd.f32 %v871, %v2089
  %v2091 = vpop.f32.mrb[0].mxu0
  %v2092 = vadd.f32 %v875, %v2091
  %v2093 = vpop.f32.mrb[0].mxu0
  %v2094 = vpop.f32.mrb[0].mxu0
  %2095 = vdwg.mxu0
  %2096 = vmatprep.subr.bf16.mxu0 %v1720
  %2097 = vmatpush1.bf16.msra.mxu0 %v1719
  %2098 = vmatprep.subr.bf16.mxu0 %v1727
  %2099 = vmatpush1.bf16.msra.mxu0 %v1726
  %2100 = vmatprep.subr.bf16.mxu0 %v1734
  %2101 = vmatpush1.bf16.msra.mxu0 %v1733
  %2102 = vmatprep.subr.bf16.mxu0 %v1741
  %2103 = vmatpush1.bf16.msra.mxu0 %v1740
  %2104 = vmatprep.subr.bf16.mxu0 %v1748
  %2105 = vmatpush1.bf16.msra.mxu0 %v1747
  %2106 = vmatprep.subr.bf16.mxu0 %v1755
  %2107 = vmatpush1.bf16.msra.mxu0 %v1754
  %2108 = vmatprep.subr.bf16.mxu0 %v1762
  %2109 = vmatpush1.bf16.msra.mxu0 %v1761
  %2110 = vmatprep.subr.bf16.mxu0 %v1769
  %2111 = vmatpush1.bf16.msra.mxu0 %v1768
  %2112 = vmatprep.subr.bf16.mxu0 %v1776
  %2113 = vmatpush1.bf16.msra.mxu0 %v1775
  %2114 = vmatprep.subr.bf16.mxu0 %v1783
  %2115 = vmatpush1.bf16.msra.mxu0 %v1782
  %2116 = vmatprep.subr.bf16.mxu0 %v1790
  %2117 = vmatpush1.bf16.msra.mxu0 %v1789
  %2118 = vmatprep.subr.bf16.mxu0 %v1797
  %2119 = vmatpush1.bf16.msra.mxu0 %v1796
  %2120 = vmatprep.subr.bf16.mxu0 %v1804
  %2121 = vmatpush1.bf16.msra.mxu0 %v1803
  %2122 = vmatprep.subr.bf16.mxu0 %v1811
  %2123 = vmatpush1.bf16.msra.mxu0 %v1810
  %2124 = vmatprep.subr.bf16.mxu0 %v1818
  %2125 = vmatpush1.bf16.msra.mxu0 %v1817
  %2126 = vmatprep.subr.bf16.mxu0 %v1825
  %2127 = vmatpush1.bf16.msra.mxu0 %v1824
  %2128 = vmatprep.mubr.bf16.mxu0 %v609
  %2129 = vmatmul.mubr.bf16.gmra.mrb[0].mxu0 %v608
  %v2130 = vpop.f32.mrb[0].mxu0
  %v2131 = vadd.f32 %v2090, %v2130
  %v2132 = vpop.f32.mrb[0].mxu0
  %v2133 = vadd.f32 %v2092, %v2132
  %v2134 = vpop.f32.mrb[0].mxu0
  %v2135 = vpop.f32.mrb[0].mxu0
  %2136 = vdwg.mxu0
  %2137 = vmatprep.subr.bf16.mxu0 %v1610
  %2138 = vmatpush1.bf16.msra.mxu0 %v1609
  %2139 = vmatprep.subr.bf16.mxu0 %v1617
  %2140 = vmatpush1.bf16.msra.mxu0 %v1616
  %2141 = vmatprep.subr.bf16.mxu0 %v1624
  %2142 = vmatpush1.bf16.msra.mxu0 %v1623
  %2143 = vmatprep.subr.bf16.mxu0 %v1631
  %2144 = vmatpush1.bf16.msra.mxu0 %v1630
  %2145 = vmatprep.subr.bf16.mxu0 %v1638
  %2146 = vmatpush1.bf16.msra.mxu0 %v1637
  %2147 = vmatprep.subr.bf16.mxu0 %v1645
  %2148 = vmatpush1.bf16.msra.mxu0 %v1644
  %2149 = vmatprep.subr.bf16.mxu0 %v1652
  %2150 = vmatpush1.bf16.msra.mxu0 %v1651
  %2151 = vmatprep.subr.bf16.mxu0 %v1659
  %2152 = vmatpush1.bf16.msra.mxu0 %v1658
  %2153 = vmatprep.subr.bf16.mxu0 %v1666
  %2154 = vmatpush1.bf16.msra.mxu0 %v1665
  %2155 = vmatprep.subr.bf16.mxu0 %v1673
  %2156 = vmatpush1.bf16.msra.mxu0 %v1672
  %2157 = vmatprep.subr.bf16.mxu0 %v1680
  %2158 = vmatpush1.bf16.msra.mxu0 %v1679
  %2159 = vmatprep.subr.bf16.mxu0 %v1687
  %2160 = vmatpush1.bf16.msra.mxu0 %v1686
  %2161 = vmatprep.subr.bf16.mxu0 %v1694
  %2162 = vmatpush1.bf16.msra.mxu0 %v1693
  %2163 = vmatprep.subr.bf16.mxu0 %v1701
  %2164 = vmatpush1.bf16.msra.mxu0 %v1700
  %2165 = vmatprep.subr.bf16.mxu0 %v1708
  %2166 = vmatpush1.bf16.msra.mxu0 %v1707
  %2167 = vmatprep.subr.bf16.mxu0 %v1715
  %2168 = vmatpush1.bf16.msra.mxu0 %v1714
  %2169 = vmatprep.mubr.bf16.mxu0 %v607
  %2170 = vmatmul.mubr.bf16.gmra.mrb[0].mxu0 %v606
  %v2171 = vpop.f32.mrb[0].mxu0
  %v2172 = vadd.f32 %v879, %v2171
  %v2173 = vpop.f32.mrb[0].mxu0
  %v2174 = vadd.f32 %v883, %v2173
  %v2175 = vpop.f32.mrb[0].mxu0
  %v2176 = vpop.f32.mrb[0].mxu0
  %2177 = vdwg.mxu0
  %2178 = vmatprep.subr.bf16.mxu0 %v1722
  %2179 = vmatpush1.bf16.msra.mxu0 %v1721
  %2180 = vmatprep.subr.bf16.mxu0 %v1729
  %2181 = vmatpush1.bf16.msra.mxu0 %v1728
  %2182 = vmatprep.subr.bf16.mxu0 %v1736
  %2183 = vmatpush1.bf16.msra.mxu0 %v1735
  %2184 = vmatprep.subr.bf16.mxu0 %v1743
  %2185 = vmatpush1.bf16.msra.mxu0 %v1742
  %2186 = vmatprep.subr.bf16.mxu0 %v1750
  %2187 = vmatpush1.bf16.msra.mxu0 %v1749
  %2188 = vmatprep.subr.bf16.mxu0 %v1757
  %2189 = vmatpush1.bf16.msra.mxu0 %v1756
  %2190 = vmatprep.subr.bf16.mxu0 %v1764
  %2191 = vmatpush1.bf16.msra.mxu0 %v1763
  %2192 = vmatprep.subr.bf16.mxu0 %v1771
  %2193 = vmatpush1.bf16.msra.mxu0 %v1770
  %2194 = vmatprep.subr.bf16.mxu0 %v1778
  %2195 = vmatpush1.bf16.msra.mxu0 %v1777
  %2196 = vmatprep.subr.bf16.mxu0 %v1785
  %2197 = vmatpush1.bf16.msra.mxu0 %v1784
  %2198 = vmatprep.subr.bf16.mxu0 %v1792
  %2199 = vmatpush1.bf16.msra.mxu0 %v1791
  %2200 = vmatprep.subr.bf16.mxu0 %v1799
  %2201 = vmatpush1.bf16.msra.mxu0 %v1798
  %2202 = vmatprep.subr.bf16.mxu0 %v1806
  %2203 = vmatpush1.bf16.msra.mxu0 %v1805
  %2204 = vmatprep.subr.bf16.mxu0 %v1813
  %2205 = vmatpush1.bf16.msra.mxu0 %v1812
  %2206 = vmatprep.subr.bf16.mxu0 %v1820
  %2207 = vmatpush1.bf16.msra.mxu0 %v1819
  %2208 = vmatprep.subr.bf16.mxu0 %v1827
  %2209 = vmatpush1.bf16.msra.mxu0 %v1826
  %2210 = vmatprep.mubr.bf16.mxu0 %v609
  %2211 = vmatmul.mubr.bf16.gmra.mrb[0].mxu0 %v608
  %v2212 = vpop.f32.mrb[0].mxu0
  %v2213 = vadd.f32 %v2172, %v2212
  %v2214 = vpop.f32.mrb[0].mxu0
  %v2215 = vadd.f32 %v2174, %v2214
  %v2216 = vpop.f32.mrb[0].mxu0
  %v2217 = vpop.f32.mrb[0].mxu0
  %2218 = vdwg.mxu0
  %2219 = vmatprep.subr.bf16.mxu0 %v1612
  %2220 = vmatpush1.bf16.msra.mxu0 %v1611
  %2221 = vmatprep.subr.bf16.mxu0 %v1619
  %2222 = vmatpush1.bf16.msra.mxu0 %v1618
  %2223 = vmatprep.subr.bf16.mxu0 %v1626
  %2224 = vmatpush1.bf16.msra.mxu0 %v1625
  %2225 = vmatprep.subr.bf16.mxu0 %v1633
  %2226 = vmatpush1.bf16.msra.mxu0 %v1632
  %2227 = vmatprep.subr.bf16.mxu0 %v1640
  %2228 = vmatpush1.bf16.msra.mxu0 %v1639
  %2229 = vmatprep.subr.bf16.mxu0 %v1647
  %2230 = vmatpush1.bf16.msra.mxu0 %v1646
  %2231 = vmatprep.subr.bf16.mxu0 %v1654
  %2232 = vmatpush1.bf16.msra.mxu0 %v1653
  %2233 = vmatprep.subr.bf16.mxu0 %v1661
  %2234 = vmatpush1.bf16.msra.mxu0 %v1660
  %2235 = vmatprep.subr.bf16.mxu0 %v1668
  %2236 = vmatpush1.bf16.msra.mxu0 %v1667
  %2237 = vmatprep.subr.bf16.mxu0 %v1675
  %2238 = vmatpush1.bf16.msra.mxu0 %v1674
  %2239 = vmatprep.subr.bf16.mxu0 %v1682
  %2240 = vmatpush1.bf16.msra.mxu0 %v1681
  %2241 = vmatprep.subr.bf16.mxu0 %v1689
  %2242 = vmatpush1.bf16.msra.mxu0 %v1688
  %2243 = vmatprep.subr.bf16.mxu0 %v1696
  %2244 = vmatpush1.bf16.msra.mxu0 %v1695
  %2245 = vmatprep.subr.bf16.mxu0 %v1703
  %2246 = vmatpush1.bf16.msra.mxu0 %v1702
  %2247 = vmatprep.subr.bf16.mxu0 %v1710
  %2248 = vmatpush1.bf16.msra.mxu0 %v1709
  %2249 = vmatprep.subr.bf16.mxu0 %v1717
  %2250 = vmatpush1.bf16.msra.mxu0 %v1716
  %2251 = vmatprep.mubr.bf16.mxu0 %v607
  %2252 = vmatmul.mubr.bf16.gmra.mrb[0].mxu0 %v606
  %v2253 = vpop.f32.mrb[0].mxu0
  %v2254 = vadd.f32 %v887, %v2253
  %v2255 = vpop.f32.mrb[0].mxu0
  %v2256 = vadd.f32 %v891, %v2255
  %v2257 = vpop.f32.mrb[0].mxu0
  %v2258 = vpop.f32.mrb[0].mxu0
  %2259 = vdwg.mxu0
  %2260 = vmatprep.subr.bf16.mxu0 %v1724
  %2261 = vmatpush1.bf16.msra.mxu0 %v1723
  %2262 = vmatprep.subr.bf16.mxu0 %v1731
  %2263 = vmatpush1.bf16.msra.mxu0 %v1730
  %2264 = vmatprep.subr.bf16.mxu0 %v1738
  %2265 = vmatpush1.bf16.msra.mxu0 %v1737
  %2266 = vmatprep.subr.bf16.mxu0 %v1745
  %2267 = vmatpush1.bf16.msra.mxu0 %v1744
  %2268 = vmatprep.subr.bf16.mxu0 %v1752
  %2269 = vmatpush1.bf16.msra.mxu0 %v1751
  %2270 = vmatprep.subr.bf16.mxu0 %v1759
  %2271 = vmatpush1.bf16.msra.mxu0 %v1758
  %2272 = vmatprep.subr.bf16.mxu0 %v1766
  %2273 = vmatpush1.bf16.msra.mxu0 %v1765
  %2274 = vmatprep.subr.bf16.mxu0 %v1773
  %2275 = vmatpush1.bf16.msra.mxu0 %v1772
  %2276 = vmatprep.subr.bf16.mxu0 %v1780
  %2277 = vmatpush1.bf16.msra.mxu0 %v1779
  %2278 = vmatprep.subr.bf16.mxu0 %v1787
  %2279 = vmatpush1.bf16.msra.mxu0 %v1786
  %2280 = vmatprep.subr.bf16.mxu0 %v1794
  %2281 = vmatpush1.bf16.msra.mxu0 %v1793
  %2282 = vmatprep.subr.bf16.mxu0 %v1801
  %2283 = vmatpush1.bf16.msra.mxu0 %v1800
  %2284 = vmatprep.subr.bf16.mxu0 %v1808
  %2285 = vmatpush1.bf16.msra.mxu0 %v1807
  %2286 = vmatprep.subr.bf16.mxu0 %v1815
  %2287 = vmatpush1.bf16.msra.mxu0 %v1814
  %2288 = vmatprep.subr.bf16.mxu0 %v1822
  %2289 = vmatpush1.bf16.msra.mxu0 %v1821
  %2290 = vmatprep.subr.bf16.mxu0 %v1829
  %2291 = vmatpush1.bf16.msra.mxu0 %v1828
  %2292 = vmatprep.mubr.bf16.mxu0 %v609
  %2293 = vmatmul.mubr.bf16.gmra.mrb[0].mxu0 %v608
  %v2294 = vpop.f32.mrb[0].mxu0
  %v2295 = vadd.f32 %v2254, %v2294
  %v2296 = vpop.f32.mrb[0].mxu0
  %v2297 = vadd.f32 %v2256, %v2296
  %v2298 = vpop.f32.mrb[0].mxu0
  %v2299 = vpop.f32.mrb[0].mxu0
  %2300 = vdwg.mxu0
  %2301 = vmatprep.subr.bf16.mxu0 0
  %2302 = vmatpush1.bf16.msra.mxu0 %v1613
  %2303 = vmatprep.subr.bf16.mxu0 0
  %2304 = vmatpush1.bf16.msra.mxu0 %v1620
  %2305 = vmatprep.subr.bf16.mxu0 0
  %2306 = vmatpush1.bf16.msra.mxu0 %v1627
  %2307 = vmatprep.subr.bf16.mxu0 0
  %2308 = vmatpush1.bf16.msra.mxu0 %v1634
  %2309 = vmatprep.subr.bf16.mxu0 0
  %2310 = vmatpush1.bf16.msra.mxu0 %v1641
  %2311 = vmatprep.subr.bf16.mxu0 0
  %2312 = vmatpush1.bf16.msra.mxu0 %v1648
  %2313 = vmatprep.subr.bf16.mxu0 0
  %2314 = vmatpush1.bf16.msra.mxu0 %v1655
  %2315 = vmatprep.subr.bf16.mxu0 0
  %2316 = vmatpush1.bf16.msra.mxu0 %v1662
  %2317 = vmatprep.subr.bf16.mxu0 0
  %2318 = vmatpush1.bf16.msra.mxu0 %v1669
  %2319 = vmatprep.subr.bf16.mxu0 0
  %2320 = vmatpush1.bf16.msra.mxu0 %v1676
  %2321 = vmatprep.subr.bf16.mxu0 0
  %2322 = vmatpush1.bf16.msra.mxu0 %v1683
  %2323 = vmatprep.subr.bf16.mxu0 0
  %2324 = vmatpush1.bf16.msra.mxu0 %v1690
  %2325 = vmatprep.subr.bf16.mxu0 0
  %2326 = vmatpush1.bf16.msra.mxu0 %v1697
  %2327 = vmatprep.subr.bf16.mxu0 0
  %2328 = vmatpush1.bf16.msra.mxu0 %v1704
  %2329 = vmatprep.subr.bf16.mxu0 0
  %2330 = vmatpush1.bf16.msra.mxu0 %v1711
  %2331 = vmatprep.subr.bf16.mxu0 0
  %2332 = vmatpush1.bf16.msra.mxu0 %v1718
  %2333 = vmatprep.mubr.bf16.mxu0 %v607
  %2334 = vmatmul.mubr.bf16.gmra.mrb[0].mxu0 %v606
  %v2335 = vpop.f32.mrb[0].mxu0
  %v2336 = vadd.f32 %v895, %v2335
  %v2337 = vpop.f32.mrb[0].mxu0
  %v2338 = vpop.f32.mrb[0].mxu0
  %v2339 = vpop.f32.mrb[0].mxu0
  %2340 = vdwg.mxu0
  %2341 = vmatprep.subr.bf16.mxu0 0
  %2342 = vmatpush1.bf16.msra.mxu0 %v1725
  %2343 = vmatprep.subr.bf16.mxu0 0
  %2344 = vmatpush1.bf16.msra.mxu0 %v1732
  %2345 = vmatprep.subr.bf16.mxu0 0
  %2346 = vmatpush1.bf16.msra.mxu0 %v1739
  %2347 = vmatprep.subr.bf16.mxu0 0
  %2348 = vmatpush1.bf16.msra.mxu0 %v1746
  %2349 = vmatprep.subr.bf16.mxu0 0
  %2350 = vmatpush1.bf16.msra.mxu0 %v1753
  %2351 = vmatprep.subr.bf16.mxu0 0
  %2352 = vmatpush1.bf16.msra.mxu0 %v1760
  %2353 = vmatprep.subr.bf16.mxu0 0
  %2354 = vmatpush1.bf16.msra.mxu0 %v1767
  %2355 = vmatprep.subr.bf16.mxu0 0
  %2356 = vmatpush1.bf16.msra.mxu0 %v1774
  %2357 = vmatprep.subr.bf16.mxu0 0
  %2358 = vmatpush1.bf16.msra.mxu0 %v1781
  %2359 = vmatprep.subr.bf16.mxu0 0
  %2360 = vmatpush1.bf16.msra.mxu0 %v1788
  %2361 = vmatprep.subr.bf16.mxu0 0
  %2362 = vmatpush1.bf16.msra.mxu0 %v1795
  %2363 = vmatprep.subr.bf16.mxu0 0
  %2364 = vmatpush1.bf16.msra.mxu0 %v1802
  %2365 = vmatprep.subr.bf16.mxu0 0
  %2366 = vmatpush1.bf16.msra.mxu0 %v1809
  %2367 = vmatprep.subr.bf16.mxu0 0
  %2368 = vmatpush1.bf16.msra.mxu0 %v1816
  %2369 = vmatprep.subr.bf16.mxu0 0
  %2370 = vmatpush1.bf16.msra.mxu0 %v1823
  %2371 = vmatprep.subr.bf16.mxu0 0
  %2372 = vmatpush1.bf16.msra.mxu0 %v1830
  %2373 = vmatprep.mubr.bf16.mxu0 %v609
  %2374 = vmatmul.mubr.bf16.gmra.mrb[0].mxu0 %v608
  %v2375 = vpop.f32.mrb[0].mxu0
  %v2376 = vadd.f32 %v2336, %v2375
  %v2377 = vpop.f32.mrb[0].mxu0
  %v2378 = vpop.f32.mrb[0].mxu0
  %v2379 = vpop.f32.mrb[0].mxu0
  %2380 = vdwg.mxu0
  %v2381 = vxor.u32 %v2131, 2147483648
  %v2382 = vxor.u32 %v2133, 2147483648
  %v2383 = vxor.u32 %v2213, 2147483648
  %v2384 = vxor.u32 %v2215, 2147483648
  %v2385 = vxor.u32 %v2295, 2147483648
  %v2386 = vxor.u32 %v2297, 2147483648
  %v2387 = vxor.u32 %v2376, 2147483648
  %v2388 = vmul.f32 %v2381, 1.442695
  %v2389 = vpow.pop %v2388
  %v2390 = vmul.f32 %v2382, 1.442695
  %v2391 = vpow.pop %v2390
  %v2392 = vmul.f32 %v2383, 1.442695
  %v2393 = vpow.pop %v2392
  %v2394 = vmul.f32 %v2384, 1.442695
  %v2395 = vpow.pop %v2394
  %v2396 = vmul.f32 %v2385, 1.442695
  %v2397 = vpow.pop %v2396
  %v2398 = vmul.f32 %v2386, 1.442695
  %v2399 = vpow.pop %v2398
  %v2400 = vmul.f32 %v2387, 1.442695
  %v2401 = vpow.pop %v2400
  %v2402 = vadd.f32 %v2389, 1.0
  %v2403 = vadd.f32 %v2391, 1.0
  %v2404 = vadd.f32 %v2393, 1.0
  %v2405 = vadd.f32 %v2395, 1.0
  %v2406 = vadd.f32 %v2397, 1.0
  %v2407 = vadd.f32 %v2399, 1.0
  %v2408 = vadd.f32 %v2401, 1.0
  %v2409 = vrcp.pop %v2402
  %v2410 = vmul.f32 1.0, %v2409
  %v2411 = vrcp.pop %v2403
  %v2412 = vmul.f32 1.0, %v2411
  %v2413 = vrcp.pop %v2404
  %v2414 = vmul.f32 1.0, %v2413
  %v2415 = vrcp.pop %v2405
  %v2416 = vmul.f32 1.0, %v2415
  %v2417 = vrcp.pop %v2406
  %v2418 = vmul.f32 1.0, %v2417
  %v2419 = vrcp.pop %v2407
  %v2420 = vmul.f32 1.0, %v2419
  %v2421 = vrcp.pop %v2408
  %v2422 = vmul.f32 1.0, %v2421
  %2423 = vst [vmem:[%s7] sm:$0xff] %v2410
  %2424 = vst [vmem:[%s7 + $0x8] sm:$0xff] %v2412
  %2425 = vst [vmem:[%s7 + $0x10] sm:$0xff] %v2414
  %2426 = vst [vmem:[%s7 + $0x18] sm:$0xff] %v2416
  %2427 = vst [vmem:[%s7 + $0x20] sm:$0xff] %v2418
  %2428 = vst [vmem:[%s7 + $0x28] sm:$0xff] %v2420
  %2429 = vst [vmem:[%s7 + $0x30] sm:$0xff] %v2422
  // Predicated region
  $region30: #{decoder_forward.1} parent=0 // pred_check
    _
  $region31: #{decoder_forward.1} parent=0 // pred_check_branch
    %2431 = sbr.rel (0) target = $region33
  $region32: #{decoder_forward.1} parent=0 // pred_region
    _
  $region33: #{decoder_forward.1} parent=0 // pred_fallthru
    _
  // Predicated region
  $region34: #{decoder_forward.1} parent=0 // pred_check
    _
  $region35: #{decoder_forward.1} parent=0 // pred_check_branch
    %2433 = sbr.rel (0) target = $region37
  $region36: #{decoder_forward.1} parent=0 // pred_region
    _
  $region37: #{decoder_forward.1} parent=0 // pred_fallthru
    _

</llo_original>
